<compile_context>
chip_gen: v5e
topology: v5e:2x2
jax: 0.10.0
libtpu: 0.0.40
codegen_flags: <defaults>
</compile_context>

<pallas_src>
import functools
import math

import numpy as np
import jax
import jax.numpy as jnp
from jax import lax
from jax.experimental import pallas as pl
from jax.experimental.pallas import tpu as pltpu

PRELU_ALPHA = 0.25           # nn.PReLU() default init
_F32 = jnp.float32
_BF16 = jnp.bfloat16
_VMEM_LIMIT = 48 * 1024 * 1024   # safe on v5e/v6e (128 MiB phys) and v7x (64 MiB phys)


def _round_up(x, m):
    return ((x + m - 1) // m) * m


def _sigmoid(y):
    # numerically-stable sigmoid via tanh (safe to lower inside Mosaic)
    return 0.5 * (jnp.tanh(0.5 * y) + 1.0)


# ---------------------------------------------------------------------------
# Pallas kernel 1: fused  y = act(x @ w + b)   (conv-as-matmul hot path, bf16 MXU)
# ---------------------------------------------------------------------------
def _matmul_bias_act_kernel(x_ref, w_ref, b_ref, o_ref, acc_ref, *, act, alpha):
    @pl.when(pl.program_id(2) == 0)
    def _():
        acc_ref[...] = jnp.zeros_like(acc_ref)

    acc_ref[...] += jnp.dot(x_ref[...], w_ref[...],
                            preferred_element_type=jnp.float32)

    @pl.when(pl.program_id(2) == pl.num_programs(2) - 1)
    def _():
        y = acc_ref[...] + b_ref[...]
        if act == "relu":
            y = jnp.maximum(y, 0.0)
        elif act == "prelu":
            y = jnp.where(y > 0, y, alpha * y)
        elif act == "sigmoid":
            y = _sigmoid(y)
        o_ref[...] = y.astype(o_ref.dtype)


def _pick_tiles(M, K, N):
    # M tile: single block for small M (rounded to a bf16-friendly multiple of 16),
    # otherwise 512 rows.
    if M <= 1024:
        tm = _round_up(M, 16)
    else:
        tm = 512
    Mp = _round_up(M, tm)
    m_blocks = Mp // tm

    # K tile: one block when small, otherwise pick the candidate with least padding
    # (most Ks in this model are multiples of 256*9 / powers of two -> zero pad).
    Kp128 = _round_up(K, 128)
    if Kp128 <= 1536:
        tk = Kp128
    else:
        tk, best_pad = 512, None
        for cand in (1024, 896, 768, 640, 512):
            pad = _round_up(K, cand) - K
            if best_pad is None or pad < best_pad:
                tk, best_pad = cand, pad
    Kp = _round_up(K, tk)

    # N tile: 256 fills the 256-wide MXU on v6e/v7x; fall back to 128 so that
    # small-M matmuls still expose >=2 N blocks for megacore sharding.
    Np128 = _round_up(N, 128)
    if Np128 <= 128 or (m_blocks == 1 and Np128 == 256):
        tn = 128
    else:
        tn = 256
    Np = _round_up(N, tn)
    return tm, tk, tn, Mp, Kp, Np


@functools.partial(jax.jit, static_argnames=("act", "alpha"))
def matmul_bias_act(x, w, b, *, act="none", alpha=PRELU_ALPHA):
    """x:(M,K) w:(K,N) b:(N,) -> act(x@w + b); bf16 MXU inputs, f32 accumulator."""
    M, K = x.shape
    _, N = w.shape
    tm, tk, tn, Mp, Kp, Np = _pick_tiles(M, K, N)

    xp = jnp.pad(x.astype(_BF16), ((0, Mp - M), (0, Kp - K)))
    wp = jnp.pad(w.astype(_BF16), ((0, Kp - K), (0, Np - N)))
    bp = jnp.pad(b.astype(_F32).reshape(1, N), ((0, 0), (0, Np - N)))

    out = pl.pallas_call(
        functools.partial(_matmul_bias_act_kernel, act=act, alpha=float(alpha)),
        out_shape=jax.ShapeDtypeStruct((Mp, Np), _F32),
        grid_spec=pltpu.PrefetchScalarGridSpec(
            num_scalar_prefetch=0,
            grid=(Mp // tm, Np // tn, Kp // tk),
            in_specs=[
                pl.BlockSpec((tm, tk), lambda i, j, k: (i, k)),
                pl.BlockSpec((tk, tn), lambda i, j, k: (k, j)),
                pl.BlockSpec((1, tn), lambda i, j, k: (0, j)),
            ],
            out_specs=pl.BlockSpec((tm, tn), lambda i, j, k: (i, j)),
            scratch_shapes=[pltpu.VMEM((tm, tn), jnp.float32)],
        ),
        compiler_params=pltpu.CompilerParams(
            dimension_semantics=("parallel", "parallel", "arbitrary"),
            vmem_limit_bytes=_VMEM_LIMIT),
    )(xp, wp, bp)
    return out[:M, :N]


# ---------------------------------------------------------------------------
# Pallas kernel 2: lane-dense tiled elementwise (binary add/sub/add_relu, unary sigmoid)
# ---------------------------------------------------------------------------
def _ew2_kernel(a_ref, b_ref, o_ref, *, op):
    a = a_ref[...]
    b = b_ref[...]
    if op == "add":
        o_ref[...] = a + b
    elif op == "sub":
        o_ref[...] = a - b
    elif op == "add_relu":
        o_ref[...] = jnp.maximum(a + b, 0.0)
    else:
        raise ValueError(op)


def _ew1_kernel(a_ref, o_ref, *, op):
    if op == "sigmoid":
        o_ref[...] = _sigmoid(a_ref[...])
    else:
        raise ValueError(op)


def _ew_tiles(n):
    TC = 512
    R = -(-n // TC)
    TR = min(256, _round_up(R, 8))
    Rp = _round_up(R, TR)
    return TC, TR, Rp


@functools.partial(jax.jit, static_argnames=("op",))
def _ew2_flat(a, b, *, op):
    n = a.shape[0]
    TC, TR, Rp = _ew_tiles(n)
    npad = Rp * TC
    a2 = jnp.pad(a, (0, npad - n)).reshape(Rp, TC)
    b2 = jnp.pad(b, (0, npad - n)).reshape(Rp, TC)
    out = pl.pallas_call(
        functools.partial(_ew2_kernel, op=op),
        out_shape=jax.ShapeDtypeStruct((Rp, TC), _F32),
        grid=(Rp // TR,),
        in_specs=[pl.BlockSpec((TR, TC), lambda i: (i, 0)),
                  pl.BlockSpec((TR, TC), lambda i: (i, 0))],
        out_specs=pl.BlockSpec((TR, TC), lambda i: (i, 0)),
        compiler_params=pltpu.CompilerParams(dimension_semantics=("parallel",)),
    )(a2, b2)
    return out.reshape(-1)[:n]


@jax.jit
def _sigmoid_flat(a):
    n = a.shape[0]
    TC, TR, Rp = _ew_tiles(n)
    npad = Rp * TC
    a2 = jnp.pad(a, (0, npad - n)).reshape(Rp, TC)
    out = pl.pallas_call(
        functools.partial(_ew1_kernel, op="sigmoid"),
        out_shape=jax.ShapeDtypeStruct((Rp, TC), _F32),
        grid=(Rp // TR,),
        in_specs=[pl.BlockSpec((TR, TC), lambda i: (i, 0))],
        out_specs=pl.BlockSpec((TR, TC), lambda i: (i, 0)),
        compiler_params=pltpu.CompilerParams(dimension_semantics=("parallel",)),
    )(a2)
    return out.reshape(-1)[:n]


def ew(a, b, op):
    assert a.shape == b.shape
    return _ew2_flat(a.astype(_F32).reshape(-1),
                     b.astype(_F32).reshape(-1), op=op).reshape(a.shape)


def sigmoid_act(a):
    return _sigmoid_flat(a.astype(_F32).reshape(-1)).reshape(a.shape)


# ---------------------------------------------------------------------------
# Pallas kernel 3: row-scale multiply  feat(B,H,W,C) * att(B,H,W,1)
# (attention map streamed as a (M,1) operand and broadcast inside the kernel)
# ---------------------------------------------------------------------------
def _rowscale_kernel(a_ref, s_ref, o_ref):
    o_ref[...] = a_ref[...] * s_ref[...]


@jax.jit
def _rowscale2d(a2, s2):
    M, C = a2.shape
    tm = 256 if M >= 256 else _round_up(M, 8)
    Mp = _round_up(M, tm)
    ap = jnp.pad(a2, ((0, Mp - M), (0, 0)))
    sp = jnp.pad(s2, ((0, Mp - M), (0, 0)))
    out = pl.pallas_call(
        _rowscale_kernel,
        out_shape=jax.ShapeDtypeStruct((Mp, C), _F32),
        grid=(Mp // tm,),
        in_specs=[pl.BlockSpec((tm, C), lambda i: (i, 0)),
                  pl.BlockSpec((tm, 1), lambda i: (i, 0))],
        out_specs=pl.BlockSpec((tm, C), lambda i: (i, 0)),
        compiler_params=pltpu.CompilerParams(dimension_semantics=("parallel",)),
    )(ap, sp)
    return out[:M]


def mul_rowscale(feat, att):
    B, H, W, C = feat.shape
    out = _rowscale2d(feat.astype(_F32).reshape(B * H * W, C),
                      att.astype(_F32).reshape(B * H * W, 1))
    return out.reshape(B, H, W, C)


# ---------------------------------------------------------------------------
# Convolution = bf16 im2col (glue, fused inside the whole-graph jit) + Pallas matmul
# ---------------------------------------------------------------------------
def conv2d(x, p, *, stride=1, padding=0, act="none", alpha=PRELU_ALPHA):
    """x: (B,H,W,Cin) NHWC.  p['w']: (Cout,Cin,kh,kw) (PyTorch layout), p['b']: (Cout,)."""
    w, b = p["w"], p["b"]
    B, H, W, Cin = x.shape
    Cout, _, kh, kw = w.shape
    Ho = (H + 2 * padding - kh) // stride + 1
    Wo = (W + 2 * padding - kw) // stride + 1
    xb = x.astype(_BF16)
    if padding:
        xb = jnp.pad(xb, ((0, 0), (padding, padding), (padding, padding), (0, 0)))
    if kh == 1 and kw == 1:
        xs = xb[:, ::stride, ::stride, :] if stride > 1 else xb
        xmat = xs.reshape(B * Ho * Wo, Cin)
    else:
        cols = []
        for di in range(kh):
            for dj in range(kw):
                cols.append(xb[:, di:di + stride * Ho:stride,
                               dj:dj + stride * Wo:stride, :])
        patches = cols[0] if len(cols) == 1 else jnp.concatenate(cols, axis=-1)
        xmat = patches.reshape(B * Ho * Wo, kh * kw * Cin)
    wmat = jnp.transpose(w, (2, 3, 1, 0)).reshape(kh * kw * Cin, Cout).astype(_BF16)
    y = matmul_bias_act(xmat, wmat, b.astype(_F32), act=act, alpha=alpha)
    return y.reshape(B, Ho, Wo, Cout)


# ---------------------------------------------------------------------------
# Plain-JAX glue: pooling, bilinear resize, PPM
# ---------------------------------------------------------------------------
def max_pool_3x3_s2_p1(x):
    return lax.reduce_window(x, -jnp.inf, lax.max, (1, 3, 3, 1), (1, 2, 2, 1),
                             [(0, 0), (1, 1), (1, 1), (0, 0)])


def avg_pool(x, k):
    s = lax.reduce_window(x, 0.0, lax.add, (1, k, k, 1), (1, k, k, 1), "VALID")
    return s / float(k * k)


def upsample_bilinear(x, H, W):
    B, _, _, C = x.shape
    return jax.image.resize(x, (B, H, W, C), method="bilinear")


def PPM(x):
    B, H, W, C = x.shape
    p2, p4, p6 = avg_pool(x, 2), avg_pool(x, 4), avg_pool(x, 6)
    pg = jnp.mean(x, axis=(1, 2), keepdims=True)
    return jnp.concatenate([upsample_bilinear(p2, H, W),
                            upsample_bilinear(p4, H, W),
                            upsample_bilinear(p6, H, W),
                            upsample_bilinear(pg, H, W)], axis=-1)


# ---------------------------------------------------------------------------
# Deterministic synthetic parameters (eval-mode BN folded into conv weight/bias)
# ---------------------------------------------------------------------------
class ParamGen:
    def __init__(self, seed=0):
        self.rng = np.random.default_rng(seed)

    def conv(self, cin, cout, k, *, bias=True, bn=False):
        fan_in = cin * k * k
        w = self.rng.normal(0.0, math.sqrt(2.0 / fan_in),
                            size=(cout, cin, k, k)).astype(np.float32)
        b = (self.rng.normal(0.0, 0.01, size=(cout,)).astype(np.float32)
             if bias else np.zeros((cout,), np.float32))
        if bn:
            # eval-mode BatchNorm with default stats (mean=0, var=1, gamma=1, beta=0)
            scale = 1.0 / math.sqrt(1.0 + 1e-5)
            w = w * scale
            b = b * scale
        return {"w": jnp.asarray(w), "b": jnp.asarray(b)}


def build_params():
    pg = ParamGen(0)
    P = {"conv1": pg.conv(3, 64, 7, bias=False, bn=True)}

    def bottleneck_params(cin, width):
        return {"conv1": pg.conv(cin, width, 1, bias=False, bn=True),
                "conv2": pg.conv(width, width, 3, bias=False, bn=True),
                "conv3": pg.conv(width, width * 4, 1, bias=False, bn=True)}

    def layer_params(cin, width, n):
        first = bottleneck_params(cin, width)
        first["down"] = pg.conv(cin, width * 4, 1, bias=False, bn=True)
        rest = [bottleneck_params(width * 4, width) for _ in range(n - 1)]
        # identical shapes -> stack for lax.scan (compile the block body once)
        stacked = jax.tree_util.tree_map(lambda *xs: jnp.stack(xs), *rest)
        return {"first": first, "rest": stacked}

    P["layer1"] = layer_params(64, 64, 3)        # ResNet-101 flow backbone
    P["layer2"] = layer_params(256, 128, 4)
    P["layer3"] = layer_params(512, 256, 23)
    P["layer4"] = layer_params(1024, 512, 3)

    for name, cin in [("T5_flow", 2048), ("T4_flow", 1024), ("T3_flow", 512),
                      ("T2_flow", 256), ("T5_rgb", 2048), ("T4_rgb", 1024),
                      ("T3_rgb", 512), ("T2_rgb", 256)]:
        P[name] = pg.conv(cin, 256, 1, bias=True, bn=True)

    def level(cat_ch, branch_chs, pos_out):
        lp = {"init1": pg.conv(cat_ch, cat_ch, 1, bias=True, bn=True),
              "init2": pg.conv(cat_ch, cat_ch, 1, bias=True, bn=True),
              "branches": []}
        for ch in branch_chs:
            lp["branches"].append({
                "sa": pg.conv(cat_ch, 1, 3, bias=True, bn=False),
                "ppm": pg.conv(4, 1, 3, bias=True, bn=False),
                "safuse": pg.conv(ch, ch, 3, bias=True, bn=True)})
        lp["pos"] = pg.conv(cat_ch, pos_out, 3, bias=True, bn=True)
        lp["neg"] = pg.conv(cat_ch, pos_out, 3, bias=True, bn=True)
        lp["fuse"] = pg.conv(pos_out, pos_out, 3, bias=True, bn=True)
        return lp

    P["T5"] = level(512, [256, 256], 512)
    P["T4"] = level(1024, [256, 256, 256, 256], 512)
    P["T3"] = level(1024, [256, 256, 256, 256], 512)
    P["T2"] = level(640, [256, 256, 64, 64], 256)
    P["T1"] = level(128, [64, 64], 128)

    P["output4_sal"] = pg.conv(512, 512, 3, bias=True, bn=True)
    P["output3_sal"] = pg.conv(512, 256, 3, bias=True, bn=True)
    P["output2_sal"] = pg.conv(256, 128, 3, bias=True, bn=True)
    P["output1_sal"] = pg.conv(128, 1, 3, bias=True, bn=False)
    return P


# ---------------------------------------------------------------------------
# Forward pass (whole graph jitted)
# ---------------------------------------------------------------------------
def bottleneck_fwd(x, bp, stride, down_p):
    identity = x
    out = conv2d(x, bp["conv1"], act="relu")
    out = conv2d(out, bp["conv2"], stride=stride, padding=1, act="relu")
    out = conv2d(out, bp["conv3"], act="none")
    if down_p is not None:
        identity = conv2d(x, down_p, stride=stride, act="none")
    return ew(out, identity, "add_relu")


def resnet_layer(x, lp, stride):
    first = lp["first"]
    bp = {k: first[k] for k in ("conv1", "conv2", "conv3")}
    x = bottleneck_fwd(x, bp, stride, first["down"])

    def body(h, blk):
        return bottleneck_fwd(h, blk, 1, None), None

    x, _ = lax.scan(body, x, lp["rest"])
    return x


def flow_backbone(P, flows):
    e1 = conv2d(flows, P["conv1"], stride=2, padding=3, act="relu")
    x = max_pool_3x3_s2_p1(e1)
    e2 = resnet_layer(x, P["layer1"], stride=1)
    e3 = resnet_layer(e2, P["layer2"], stride=2)
    e4 = resnet_layer(e3, P["layer3"], stride=2)
    e5 = resnet_layer(e4, P["layer4"], stride=2)
    return e1, e2, e3, e4, e5


def sa_branch(sa_map, feat, bp):
    att = conv2d(PPM(sa_map), bp["ppm"], padding=1, act="sigmoid")   # (B,H,W,1)
    fa = mul_rowscale(feat, att)                                     # no HBM broadcast
    e = conv2d(fa, bp["safuse"], padding=1, act="prelu")
    return ew(e, feat, "add")


def fuse_level(feats, lp):
    cat = jnp.concatenate(feats, axis=-1)
    init = conv2d(cat, lp["init1"], act="prelu")
    init = conv2d(init, lp["init2"], act="prelu")

    # All per-branch spatial-attention convs share the same input -> merge into one
    # matmul (mathematically identical, reads the big init im2col once).
    sa_w = jnp.concatenate([bp["sa"]["w"] for bp in lp["branches"]], axis=0)
    sa_b = jnp.concatenate([bp["sa"]["b"] for bp in lp["branches"]], axis=0)
    sa_all = conv2d(init, {"w": sa_w, "b": sa_b}, padding=1, act="none")

    enhanced = [sa_branch(sa_all[..., i:i + 1], f, bp)
                for i, (f, bp) in enumerate(zip(feats, lp["branches"]))]
    cat2 = jnp.concatenate(enhanced, axis=-1)

    # Positive / negative convs share the same input -> merge into one matmul.
    pos_out = lp["pos"]["w"].shape[0]
    pn_w = jnp.concatenate([lp["pos"]["w"], lp["neg"]["w"]], axis=0)
    pn_b = jnp.concatenate([lp["pos"]["b"], lp["neg"]["b"]], axis=0)
    pn = conv2d(cat2, {"w": pn_w, "b": pn_b}, padding=1, act="prelu")
    pos, neg = pn[..., :pos_out], pn[..., pos_out:]

    return conv2d(ew(pos, neg, "sub"), lp["fuse"], padding=1, act="prelu")


def _stage2_forward(P, e1_rgb, e2_rgb, e3_rgb, e4_rgb, e5_rgb,
                    output4_d, output3_d, output2_d, output1_d,
                    output4_sal, output3_sal, output2_sal, output1_sal, flows):
    nhwc = lambda t: jnp.transpose(t, (0, 2, 3, 1)).astype(_F32)
    e1_rgb, e2_rgb, e3_rgb, e4_rgb, e5_rgb = map(
        nhwc, (e1_rgb, e2_rgb, e3_rgb, e4_rgb, e5_rgb))
    o4d, o3d, o2d = map(nhwc, (output4_d, output3_d, output2_d))
    o4s, o3s, o2s = map(nhwc, (output4_sal, output3_sal, output2_sal))
    flows_n = nhwc(flows)

    e1_f, e2_f, e3_f, e4_f, e5_f = flow_backbone(P, flows_n)

    T5_flow = conv2d(e5_f, P["T5_flow"], act="prelu")
    T4_flow = conv2d(e4_f, P["T4_flow"], act="prelu")
    T3_flow = conv2d(e3_f, P["T3_flow"], act="prelu")
    T2_flow = conv2d(e2_f, P["T2_flow"], act="prelu")
    T1_flow = e1_f
    T5_rgb = conv2d(e5_rgb, P["T5_rgb"], act="prelu")
    T4_rgb = conv2d(e4_rgb, P["T4_rgb"], act="prelu")
    T3_rgb = conv2d(e3_rgb, P["T3_rgb"], act="prelu")
    T2_rgb = conv2d(e2_rgb, P["T2_rgb"], act="prelu")
    T1_rgb = e1_rgb

    T5_fuse = fuse_level([T5_rgb, T5_flow], P["T5"])
    T4_fuse = fuse_level([T4_rgb, T4_flow, o4d, o4s], P["T4"])
    T3_fuse = fuse_level([T3_rgb, T3_flow, o3d, o3s], P["T3"])
    T2_fuse = fuse_level([T2_rgb, T2_flow, o2d, o2s], P["T2"])
    T1_fuse = fuse_level([T1_rgb, T1_flow], P["T1"])

    h4, w4 = e4_rgb.shape[1:3]
    h3, w3 = e3_rgb.shape[1:3]
    h2, w2 = e2_rgb.shape[1:3]
    h1, w1 = e1_rgb.shape[1:3]
    hi, wi = flows_n.shape[1:3]

    out4 = conv2d(ew(upsample_bilinear(T5_fuse, h4, w4), T4_fuse, "add"),
                  P["output4_sal"], padding=1, act="prelu")
    out3 = conv2d(ew(upsample_bilinear(out4, h3, w3), T3_fuse, "add"),
                  P["output3_sal"], padding=1, act="prelu")
    out2 = conv2d(ew(upsample_bilinear(out3, h2, w2), T2_fuse, "add"),
                  P["output2_sal"], padding=1, act="prelu")
    out1 = conv2d(ew(upsample_bilinear(out2, h1, w1), T1_fuse, "add"),
                  P["output1_sal"], padding=1, act="none")
    out1 = upsample_bilinear(out1, hi, wi)
    out1 = sigmoid_act(out1)                   # eval mode -> F.sigmoid
    return jnp.transpose(out1, (0, 3, 1, 2))   # back to NCHW


stage2_forward = jax.jit(_stage2_forward)


# ---------------------------------------------------------------------------
if __name__ == "__main__":
    # Smallest spatial size for which PPM's 6x6 avg-pool is valid at the 1/32 level.
    B, H, W = 1, 192, 192
    names_shapes = [
        ("e1_rgb", (B, 64, H // 2, W // 2)),
        ("e2_rgb", (B, 256, H // 4, W // 4)),
        ("e3_rgb", (B, 512, H // 8, W // 8)),
        ("e4_rgb", (B, 1024, H // 16, W // 16)),
        ("e5_rgb", (B, 2048, H // 32, W // 32)),
        ("output4_d", (B, 256, H // 16, W // 16)),
        ("output3_d", (B, 256, H // 8, W // 8)),
        ("output2_d", (B, 64, H // 4, W // 4)),
        ("output1_d", (B, 1, H, W)),
        ("output4_sal", (B, 256, H // 16, W // 16)),
        ("output3_sal", (B, 256, H // 8, W // 8)),
        ("output2_sal", (B, 64, H // 4, W // 4)),
        ("output1_sal", (B, 1, H, W)),
        ("flows", (B, 3, H, W)),
    ]
    keys = jax.random.split(jax.random.PRNGKey(0), len(names_shapes))
    inputs = {n: jax.random.normal(k, s, dtype=jnp.float32) * 0.5
              for (n, s), k in zip(names_shapes, keys)}

    P = build_params()

    out = stage2_forward(
        P,
        inputs["e1_rgb"], inputs["e2_rgb"], inputs["e3_rgb"],
        inputs["e4_rgb"], inputs["e5_rgb"],
        inputs["output4_d"], inputs["output3_d"], inputs["output2_d"],
        inputs["output1_d"],
        inputs["output4_sal"], inputs["output3_sal"], inputs["output2_sal"],
        inputs["output1_sal"],
        inputs["flows"])
    out = jax.block_until_ready(out)

    assert out.shape == (B, 1, H, W), out.shape
    assert bool(jnp.all(jnp.isfinite(out)))
    assert bool(jnp.all((out >= 0.0) & (out <= 1.0)))
    print("KERNEL_OK")
</pallas_src>

<mosaic_0001>
module attributes {stable_mosaic.version = 11 : i64} {
  func.func @_matmul_bias_act_kernel(%arg0: i32, %arg1: i32, %arg2: i32, %arg3: memref<512x256xbf16, #tpu.memory_space<vmem>>, %arg4: memref<256x128xbf16, #tpu.memory_space<vmem>>, %arg5: memref<1x128xf32, #tpu.memory_space<vmem>>, %arg6: memref<512x128xf32, #tpu.memory_space<vmem>>, %arg7: memref<512x128xf32, #tpu.memory_space<vmem>>) attributes {dimension_semantics = [#tpu.dimension_semantics<parallel>, #tpu.dimension_semantics<parallel>, #tpu.dimension_semantics<arbitrary>], iteration_bounds = array<i64: 18, 1, 1>, scalar_prefetch = 0 : i64, scratch_operands = 1 : i64, tpu.core_type = #tpu.core_type<tc>, window_params = [{transform_indices = @transform_0, window_bounds = array<i64: 512, 256>}, {transform_indices = @transform_1, window_bounds = array<i64: 256, 128>}, {transform_indices = @transform_2, window_bounds = array<i64: 1, 128>}, {transform_indices = @transform_3, window_bounds = array<i64: 512, 128>}]} {
    %c0_i32 = arith.constant 0 : i32
    %0 = arith.cmpi eq, %arg2, %c0_i32 : i32
    %1 = arith.extui %0 : i1 to i32
    %c0_i32_0 = arith.constant 0 : i32
    %2 = arith.cmpi ne, %1, %c0_i32_0 : i32
    scf.if %2 {
      %cst_10 = arith.constant 0.000000e+00 : f32
      %12 = vector.broadcast %cst_10 : f32 to vector<512x128xf32>
      %c0_11 = arith.constant 0 : index
      %c0_12 = arith.constant 0 : index
      %13 = vector.load %arg7[%c0_11, %c0_12] : memref<512x128xf32, #tpu.memory_space<vmem>>, vector<512x128xf32>
      tpu.vector_store %arg7[%c0_11, %c0_12], %12 {strides = array<i32>} : memref<512x128xf32, #tpu.memory_space<vmem>>, vector<512x128xf32>,
    } else {
    }
    %c0 = arith.constant 0 : index
    %c0_1 = arith.constant 0 : index
    %3 = vector.load %arg7[%c0, %c0_1] : memref<512x128xf32, #tpu.memory_space<vmem>>, vector<512x128xf32>
    %c0_2 = arith.constant 0 : index
    %c0_3 = arith.constant 0 : index
    %4 = vector.load %arg3[%c0_2, %c0_3] : memref<512x256xbf16, #tpu.memory_space<vmem>>, vector<512x256xbf16>
    %c0_4 = arith.constant 0 : index
    %c0_5 = arith.constant 0 : index
    %5 = vector.load %arg4[%c0_4, %c0_5] : memref<256x128xbf16, #tpu.memory_space<vmem>>, vector<256x128xbf16>
    %cst = arith.constant dense<0.000000e+00> : vector<512x128xf32>
    %6 = tpu.matmul %4, %5, %cst {dimension_numbers = #tpu.dot_dimension_numbers<[1], [0], [0], [1], [0, 0, 1, 1], [], []>} : vector<512x256xbf16>, vector<256x128xbf16>, vector<512x128xf32> -> vector<512x128xf32>
    %7 = arith.addf %3, %6 : vector<512x128xf32>
    %c0_6 = arith.constant 0 : index
    %c0_7 = arith.constant 0 : index
    %8 = vector.load %arg7[%c0_6, %c0_7] : memref<512x128xf32, #tpu.memory_space<vmem>>, vector<512x128xf32>
    tpu.vector_store %arg7[%c0_6, %c0_7], %7 {strides = array<i32>} : memref<512x128xf32, #tpu.memory_space<vmem>>, vector<512x128xf32>,
    %c0_i32_8 = arith.constant 0 : i32
    %9 = arith.cmpi eq, %arg2, %c0_i32_8 : i32
    %10 = arith.extui %9 : i1 to i32
    %c0_i32_9 = arith.constant 0 : i32
    %11 = arith.cmpi ne, %10, %c0_i32_9 : i32
    scf.if %11 {
      %c0_10 = arith.constant 0 : index
      %c0_11 = arith.constant 0 : index
      %12 = vector.load %arg7[%c0_10, %c0_11] : memref<512x128xf32, #tpu.memory_space<vmem>>, vector<512x128xf32>
      %c0_12 = arith.constant 0 : index
      %c0_13 = arith.constant 0 : index
      %13 = vector.load %arg5[%c0_12, %c0_13] : memref<1x128xf32, #tpu.memory_space<vmem>>, vector<1x128xf32>
      %14 = vector.broadcast %13 : vector<1x128xf32> to vector<512x128xf32>
      %15 = arith.addf %12, %14 : vector<512x128xf32>
      %cst_14 = arith.constant 0.000000e+00 : f32
      %16 = vector.broadcast %cst_14 : f32 to vector<512x128xf32>
      %17 = arith.maximumf %15, %16 : vector<512x128xf32>
      %c0_15 = arith.constant 0 : index
      %c0_16 = arith.constant 0 : index
      %18 = vector.load %arg6[%c0_15, %c0_16] : memref<512x128xf32, #tpu.memory_space<vmem>>, vector<512x128xf32>
      tpu.vector_store %arg6[%c0_15, %c0_16], %17 {strides = array<i32>} : memref<512x128xf32, #tpu.memory_space<vmem>>, vector<512x128xf32>,
    } else {
    }
    return
  }
  func.func @transform_0(%arg0: i32, %arg1: i32, %arg2: i32) -> (i32, i32) {
    %c0_i32 = arith.constant 0 : i32
    return %arg0, %arg2 : i32, i32
  }
  func.func @transform_1(%arg0: i32, %arg1: i32, %arg2: i32) -> (i32, i32) {
    %c0_i32 = arith.constant 0 : i32
    return %arg2, %arg1 : i32, i32
  }
  func.func @transform_2(%arg0: i32, %arg1: i32, %arg2: i32) -> (i32, i32) {
    %c0_i32 = arith.constant 0 : i32
    %c0_i32_0 = arith.constant 0 : i32
    return %c0_i32, %arg1 : i32, i32
  }
  func.func @transform_3(%arg0: i32, %arg1: i32, %arg2: i32) -> (i32, i32) {
    %c0_i32 = arith.constant 0 : i32
    return %arg0, %arg1 : i32, i32
  }
}

</mosaic_0001>

<llo_original>
// kernel: matmul_bias_act.1
$region0: #{matmul_bias_act.1}
  #allocation0 [shape = 'u32[]', space=smem, size = 0x4, offset = 0x4, fixed_abs, tag = 'smem constant byte address 0x4 - core index']
  #allocation1 [shape = 'u32[72,128]{1,0:T(1,128)}', space=vmem, size = 0x9000, scoped, tag = 'internal scratch']
  #allocation2 [shape = 'f32[512,128]{1,0:T(8,128)}', space=vmem, size = 0x40000, scoped, tag = 'scratch operand']
  %s0 = inlined_call_operand.vmem [shape: bf16[9216,256], index: 0, kind: input, shape index: {}]
  %s1 = inlined_call_operand.vmem [shape: bf16[256,128], index: 1, kind: input, shape index: {}]
  %s2 = inlined_call_operand.vmem [shape: f32[1,128], index: 2, kind: input, shape index: {}]
  %s3 = inlined_call_operand.vmem [shape: f32[9216,128], index: 3, kind: output, shape index: {}]
  %s4 = sld [smem:[#allocation0]]
  $region53: #{matmul_bias_act.1} parent=0
    _
  %s6 = ssub.s32 1, %s4
  %s7 = scalar_select 0, %s6, %s4
  loop: start=0, step=1, limit=20
  $region2: #{matmul_bias_act.1} parent=0 // loop_pre_header
    _
  $region3: #{matmul_bias_act.1} parent=0 // loop_header
    %s9 = sphi 0, %s13
    %p10 = scmp.ge.s32.totalorder %s9, 20
    %s16 = sphi 0, %s35
    %s17 = sphi 0, %s31
    %s18 = sphi 0, %s27
    %s19 = sphi 0, %s16
    %s20 = sphi 0, %s17
    %s21 = sphi 0, %s18
    %s22 = sphi 0, %s19
    %s23 = sphi 0, %s20
    %s24 = sphi 0, %s21
    %s40 = sphi 0, %s42
    %s43 = sphi 0, %s40
    %s44 = sphi 0, %s43
    %s60 = sphi 0, %s44
    %s68 = sphi 0, %s70
    %s71 = sphi 0, %s68
    %s72 = sphi 0, %s71
    %s88 = sphi 0, %s72
    %s94 = sphi 0, %s96
    %s97 = sphi 0, %s94
    %s98 = sphi 0, %s97
    %s114 = sphi 0, %s98
    %s122 = sphi 0, %s124
    %s125 = sphi 0, %s122
    %s126 = sphi 0, %s125
    %s142 = sphi 0, %s126
  $region4: #{matmul_bias_act.1} parent=0 // loop_header_branch
    %12 = sbr.rel (%p10) target = $region8
  $region5: #{matmul_bias_act.1} parent=0 // loop_body
    %s14 = ssub.s32 %s9, 1
    %s15 = ssub.s32 %s9, 2
    %s25 = sadd.s32 1, %s18
    %p26 = scmp.ge.s32.totalorder %s25, 1
    %s27 = scalar_select %p26, 0, %s25
    %s28 = sadd.s32 1, %s17
    %s29 = scalar_select %p26, %s28, %s17
    %p30 = scmp.ge.s32.totalorder %s29, 1
    %s31 = scalar_select %p30, 0, %s29
    %s32 = sadd.s32 1, %s16
    %s33 = scalar_select %p30, %s32, %s16
    %p34 = scmp.ge.s32.totalorder %s33, 18
    %s35 = scalar_select %p34, 0, %s33
    %s36 = ssub.s32 %s16, %s35
    %s37 = ssub.s32 %s18, %s27
    %s38 = sor.u32 %s36, %s37
    %p39 = scmp.eq.s32.totalorder %s38, 0
    %s41 = sadd.s32 %s40, 1
    %s42 = scalar_select %p39, %s40, %s41
    %p45 = pneg %p39
    %p46 = scmp.eq.s32.totalorder %s9, 17
    %p47 = por %p45, %p46
    %p48 = scmp.ne.s32.totalorder %s40, %s43
    %p49 = scmp.eq.s32.totalorder %s9, 0
    %p50 = por %p48, %p49
    %p51 = scmp.ne.s32.totalorder %s40, %s43
    %p52 = scmp.eq.s32.totalorder %s14, 17
    %p53 = por %p51, %p52
    %p54 = scmp.ne.s32.totalorder %s43, %s44
    %p55 = scmp.eq.s32.totalorder %s14, 0
    %p56 = por %p54, %p55
    %p57 = scmp.ne.s32.totalorder %s43, %s44
    %p58 = scmp.eq.s32.totalorder %s15, 17
    %p59 = por %p57, %p58
    %p61 = scmp.ne.s32.totalorder %s44, %s60
    %p62 = scmp.eq.s32.totalorder %s15, 0
    %p63 = por %p61, %p62
    %s64 = ssub.s32 %s18, %s27
    %s65 = ssub.s32 %s17, %s31
    %s66 = sor.u32 %s64, %s65
    %p67 = scmp.eq.s32.totalorder %s66, 0
    %s69 = sadd.s32 %s68, 1
    %s70 = scalar_select %p67, %s68, %s69
    %p73 = pneg %p67
    %p74 = scmp.eq.s32.totalorder %s9, 17
    %p75 = por %p73, %p74
    %p76 = scmp.ne.s32.totalorder %s68, %s71
    %p77 = scmp.eq.s32.totalorder %s9, 0
    %p78 = por %p76, %p77
    %p79 = scmp.ne.s32.totalorder %s68, %s71
    %p80 = scmp.eq.s32.totalorder %s14, 17
    %p81 = por %p79, %p80
    %p82 = scmp.ne.s32.totalorder %s71, %s72
    %p83 = scmp.eq.s32.totalorder %s14, 0
    %p84 = por %p82, %p83
    %p85 = scmp.ne.s32.totalorder %s71, %s72
    %p86 = scmp.eq.s32.totalorder %s15, 17
    %p87 = por %p85, %p86
    %p89 = scmp.ne.s32.totalorder %s72, %s88
    %p90 = scmp.eq.s32.totalorder %s15, 0
    %p91 = por %p89, %p90
    %s92 = ssub.s32 %s17, %s31
    %p93 = scmp.eq.s32.totalorder %s92, 0
    %s95 = sadd.s32 %s94, 1
    %s96 = scalar_select %p93, %s94, %s95
    %p99 = pneg %p93
    %p100 = scmp.eq.s32.totalorder %s9, 17
    %p101 = por %p99, %p100
    %p102 = scmp.ne.s32.totalorder %s94, %s97
    %p103 = scmp.eq.s32.totalorder %s9, 0
    %p104 = por %p102, %p103
    %p105 = scmp.ne.s32.totalorder %s94, %s97
    %p106 = scmp.eq.s32.totalorder %s14, 17
    %p107 = por %p105, %p106
    %p108 = scmp.ne.s32.totalorder %s97, %s98
    %p109 = scmp.eq.s32.totalorder %s14, 0
    %p110 = por %p108, %p109
    %p111 = scmp.ne.s32.totalorder %s97, %s98
    %p112 = scmp.eq.s32.totalorder %s15, 17
    %p113 = por %p111, %p112
    %p115 = scmp.ne.s32.totalorder %s98, %s114
    %p116 = scmp.eq.s32.totalorder %s15, 0
    %p117 = por %p115, %p116
    %s118 = ssub.s32 %s16, %s35
    %s119 = ssub.s32 %s17, %s31
    %s120 = sor.u32 %s118, %s119
    %p121 = scmp.eq.s32.totalorder %s120, 0
    %s123 = sadd.s32 %s122, 1
    %s124 = scalar_select %p121, %s122, %s123
    %p127 = pneg %p121
    %p128 = scmp.eq.s32.totalorder %s9, 17
    %p129 = por %p127, %p128
    %p130 = scmp.ne.s32.totalorder %s122, %s125
    %p131 = scmp.eq.s32.totalorder %s9, 0
    %p132 = por %p130, %p131
    %p133 = scmp.ne.s32.totalorder %s122, %s125
    %p134 = scmp.eq.s32.totalorder %s14, 17
    %p135 = por %p133, %p134
    %p136 = scmp.ne.s32.totalorder %s125, %s126
    %p137 = scmp.eq.s32.totalorder %s14, 0
    %p138 = por %p136, %p137
    %p139 = scmp.ne.s32.totalorder %s125, %s126
    %p140 = scmp.eq.s32.totalorder %s15, 17
    %p141 = por %p139, %p140
    %p143 = scmp.ne.s32.totalorder %s126, %s142
    %p144 = scmp.eq.s32.totalorder %s15, 0
    %p145 = por %p143, %p144
    %p146 = scmp.le.s32.totalorder 1, %s9
    %p147 = scmp.lt.s32.totalorder %s9, 19
    %p148 = pnand %p146, %p147
    %p149 = pneg %p148
    // Predicated region
    $region9: #{matmul_bias_act.1} parent=5 // pred_check
      _
    $region10: #{matmul_bias_act.1} parent=5 // pred_check_branch
      %151 = sbr.rel (%p148) target = $region12
    $region11: #{matmul_bias_act.1} parent=5 // pred_region
      %s152 = ssub.s32 %s9, 1
      // Predicated region
      $region13: #{matmul_bias_act.1} parent=11 // pred_check
        %p153 = pneg %p84
      $region14: #{matmul_bias_act.1} parent=11 // pred_check_branch
        %155 = sbr.rel (%p153) target = $region16
      $region15: #{matmul_bias_act.1} parent=11 // pred_region
        %s156 = smul.u32 32, %s21
        %p157 = scmp.lt.s32.totalorder %s156, 31
        %s158 = scalar_select %p157, %s156, 31
        %p159 = scmp.lt.s32.totalorder %s20, 0
        %s160 = scalar_select %p159, %s20, 0
        %s161 = sadd.s32 %s160, %s158
        %s162 = smul.addr %s161, 4
        %s163 = scalar_lea.vmem %s1, %s162
        %s164 = smul.u32 32, %s21
      $region16: #{matmul_bias_act.1} parent=11 // pred_fallthru
        _
      // Predicated region
      $region17: #{matmul_bias_act.1} parent=11 // pred_check
        %p165 = pneg %p110
      $region18: #{matmul_bias_act.1} parent=11 // pred_check_branch
        %167 = sbr.rel (%p165) target = $region20
      $region19: #{matmul_bias_act.1} parent=11 // pred_region
        %p168 = scmp.lt.s32.totalorder %s20, 0
        %s169 = scalar_select %p168, %s20, 0
        %s170 = scalar_lea.vmem %s2, %s169
      $region20: #{matmul_bias_act.1} parent=11 // pred_fallthru
        _
    $region12: #{matmul_bias_act.1} parent=5 // pred_fallthru
      _
    %p171 = scmp.lt.s32.totalorder %s9, 18
    // Predicated region
    $region21: #{matmul_bias_act.1} parent=5 // pred_check
      %p172 = pneg %p171
    $region22: #{matmul_bias_act.1} parent=5 // pred_check_branch
      %174 = sbr.rel (%p172) target = $region24
    $region23: #{matmul_bias_act.1} parent=5 // pred_region
      // Predicated region
      $region25: #{matmul_bias_act.1} parent=23 // pred_check
        %p175 = pneg %p50
      $region26: #{matmul_bias_act.1} parent=23 // pred_check_branch
        %177 = sbr.rel (%p175) target = $region28
      $region27: #{matmul_bias_act.1} parent=23 // pred_region
        %s178 = smul.u32 64, %s16
        %s179 = smul.u32 2, %s18
        %p180 = scmp.lt.s32.totalorder %s178, 1151
        %s181 = scalar_select %p180, %s178, 1151
        %p182 = scmp.lt.s32.totalorder %s179, 1
        %s183 = scalar_select %p182, %s179, 1
        %s184 = smul.addr %s181, 2
        %s185 = sadd.s32 %s183, %s184
        %s186 = smul.addr %s185, 4
        %s187 = scalar_lea.vmem %s0, %s186
        %s188 = smul.u32 64, %s16
        %s189 = smul.u32 2, %s18
      $region28: #{matmul_bias_act.1} parent=23 // pred_fallthru
        _
    $region24: #{matmul_bias_act.1} parent=5 // pred_fallthru
      _
    %p190 = scmp.le.s32.totalorder 1, %s9
    %p191 = scmp.lt.s32.totalorder %s9, 19
    %p192 = pnand %p190, %p191
    %p193 = pneg %p192
    // Predicated region
    $region29: #{matmul_bias_act.1} parent=5 // pred_check
      _
    $region30: #{matmul_bias_act.1} parent=5 // pred_check_branch
      %195 = sbr.rel (%p192) target = $region32
    $region31: #{matmul_bias_act.1} parent=5 // pred_region
      %s196 = ssub.s32 %s9, 1
      %s197 = smul.u32 64, %s19
      %s198 = smul.u32 2, %s21
      %p199 = scmp.lt.s32.totalorder %s197, 1151
      %s200 = scalar_select %p199, %s197, 1151
      %p201 = scmp.lt.s32.totalorder %s198, 1
      %s202 = scalar_select %p201, %s198, 1
      %s203 = smul.addr %s200, 2
      %s204 = sadd.s32 %s202, %s203
      %s205 = smul.addr %s204, 4
      %s206 = scalar_lea.vmem %s0, %s205
      %p207 = pneg %p56
      %p208 = pneg %p53
      %s209 = smul.u32 32, %s21
      %p210 = scmp.lt.s32.totalorder %s209, 31
      %s211 = scalar_select %p210, %s209, 31
      %p212 = scmp.lt.s32.totalorder %s20, 0
      %s213 = scalar_select %p212, %s20, 0
      %s214 = sadd.s32 %s213, %s211
      %s215 = smul.addr %s214, 4
      %s216 = scalar_lea.vmem %s1, %s215
      %p217 = pneg %p84
      %p218 = pneg %p81
      %p219 = scmp.lt.s32.totalorder %s20, 0
      %s220 = scalar_select %p219, %s20, 0
      %s221 = scalar_lea.vmem %s2, %s220
      %p222 = pneg %p110
      %p223 = pneg %p107
      %p224 = pneg %p138
      %p225 = pneg %p135
      %s226 = smul.u32 64, %s19
      %p227 = scmp.lt.s32.totalorder %s226, 1151
      %s228 = scalar_select %p227, %s226, 1151
      %p229 = scmp.lt.s32.totalorder %s20, 0
      %s230 = scalar_select %p229, %s20, 0
      %s231 = sadd.s32 %s230, %s228
      %s232 = smul.addr %s231, 8
      %s233 = scalar_lea.vmem %s3, %s232
      %s234 = smul.u32 64, %s19
      %s235 = smul.u32 2, %s21
      %p236 = scmp.lt.s32.totalorder %s234, 1151
      %s237 = scalar_select %p236, %s234, 1151
      %p238 = scmp.lt.s32.totalorder %s235, 1
      %s239 = scalar_select %p238, %s235, 1
      %s240 = smul.addr %s237, 2
      %s241 = sadd.s32 %s239, %s240
      %s242 = smul.addr %s241, 4
      %s243 = scalar_lea.vmem %s0, %s242
      %s244 = smul.u32 64, %s19
      %s245 = smul.u32 2, %s21
      %s246 = smul.u32 32, %s21
      %p247 = scmp.lt.s32.totalorder %s246, 31
      %s248 = scalar_select %p247, %s246, 31
      %p249 = scmp.lt.s32.totalorder %s20, 0
      %s250 = scalar_select %p249, %s20, 0
      %s251 = sadd.s32 %s250, %s248
      %s252 = smul.addr %s251, 4
      %s253 = scalar_lea.vmem %s1, %s252
      %s254 = smul.u32 32, %s21
      %p255 = scmp.lt.s32.totalorder %s20, 0
      %s256 = scalar_select %p255, %s20, 0
      %s257 = scalar_lea.vmem %s2, %s256
      %s258 = smul.u32 64, %s19
      %p259 = scmp.lt.s32.totalorder %s258, 1151
      %s260 = scalar_select %p259, %s258, 1151
      %p261 = scmp.lt.s32.totalorder %s20, 0
      %s262 = scalar_select %p261, %s20, 0
      %s263 = sadd.s32 %s262, %s260
      %s264 = smul.addr %s263, 8
      %s265 = scalar_lea.vmem %s3, %s264
      %s266 = smul.u32 64, %s19
      %p267 = scmp.eq.s32.totalorder %s21, 0
      // Predicated region
      $region33: #{matmul_bias_act.1} parent=31 // pred_check
        %p268 = pneg %p267
      $region34: #{matmul_bias_act.1} parent=31 // pred_check_branch
        %270 = sbr.rel (%p268) target = $region36
      $region35: #{matmul_bias_act.1} parent=31 // pred_region
        %271 = vst [vmem:[#allocation2] sm:$0xff] 0.0
        %272 = vst [vmem:[#allocation2 + $0x8] sm:$0xff] 0.0
        %273 = vst [vmem:[#allocation2 + $0x10] sm:$0xff] 0.0
        %274 = vst [vmem:[#allocation2 + $0x18] sm:$0xff] 0.0
        %275 = vst [vmem:[#allocation2 + $0x20] sm:$0xff] 0.0
        %276 = vst [vmem:[#allocation2 + $0x28] sm:$0xff] 0.0
        %277 = vst [vmem:[#allocation2 + $0x30] sm:$0xff] 0.0
        %278 = vst [vmem:[#allocation2 + $0x38] sm:$0xff] 0.0
        %279 = vst [vmem:[#allocation2 + $0x40] sm:$0xff] 0.0
        %280 = vst [vmem:[#allocation2 + $0x48] sm:$0xff] 0.0
        %281 = vst [vmem:[#allocation2 + $0x50] sm:$0xff] 0.0
        %282 = vst [vmem:[#allocation2 + $0x58] sm:$0xff] 0.0
        %283 = vst [vmem:[#allocation2 + $0x60] sm:$0xff] 0.0
        %284 = vst [vmem:[#allocation2 + $0x68] sm:$0xff] 0.0
        %285 = vst [vmem:[#allocation2 + $0x70] sm:$0xff] 0.0
        %286 = vst [vmem:[#allocation2 + $0x78] sm:$0xff] 0.0
        %287 = vst [vmem:[#allocation2 + $0x80] sm:$0xff] 0.0
        %288 = vst [vmem:[#allocation2 + $0x88] sm:$0xff] 0.0
        %289 = vst [vmem:[#allocation2 + $0x90] sm:$0xff] 0.0
        %290 = vst [vmem:[#allocation2 + $0x98] sm:$0xff] 0.0
        %291 = vst [vmem:[#allocation2 + $0xa0] sm:$0xff] 0.0
        %292 = vst [vmem:[#allocation2 + $0xa8] sm:$0xff] 0.0
        %293 = vst [vmem:[#allocation2 + $0xb0] sm:$0xff] 0.0
        %294 = vst [vmem:[#allocation2 + $0xb8] sm:$0xff] 0.0
        %295 = vst [vmem:[#allocation2 + $0xc0] sm:$0xff] 0.0
        %296 = vst [vmem:[#allocation2 + $0xc8] sm:$0xff] 0.0
        %297 = vst [vmem:[#allocation2 + $0xd0] sm:$0xff] 0.0
        %298 = vst [vmem:[#allocation2 + $0xd8] sm:$0xff] 0.0
        %299 = vst [vmem:[#allocation2 + $0xe0] sm:$0xff] 0.0
        %300 = vst [vmem:[#allocation2 + $0xe8] sm:$0xff] 0.0
        %301 = vst [vmem:[#allocation2 + $0xf0] sm:$0xff] 0.0
        %302 = vst [vmem:[#allocation2 + $0xf8] sm:$0xff] 0.0
        %303 = vst [vmem:[#allocation2 + $0x100] sm:$0xff] 0.0
        %304 = vst [vmem:[#allocation2 + $0x108] sm:$0xff] 0.0
        %305 = vst [vmem:[#allocation2 + $0x110] sm:$0xff] 0.0
        %306 = vst [vmem:[#allocation2 + $0x118] sm:$0xff] 0.0
        %307 = vst [vmem:[#allocation2 + $0x120] sm:$0xff] 0.0
        %308 = vst [vmem:[#allocation2 + $0x128] sm:$0xff] 0.0
        %309 = vst [vmem:[#allocation2 + $0x130] sm:$0xff] 0.0
        %310 = vst [vmem:[#allocation2 + $0x138] sm:$0xff] 0.0
        %311 = vst [vmem:[#allocation2 + $0x140] sm:$0xff] 0.0
        %312 = vst [vmem:[#allocation2 + $0x148] sm:$0xff] 0.0
        %313 = vst [vmem:[#allocation2 + $0x150] sm:$0xff] 0.0
        %314 = vst [vmem:[#allocation2 + $0x158] sm:$0xff] 0.0
        %315 = vst [vmem:[#allocation2 + $0x160] sm:$0xff] 0.0
        %316 = vst [vmem:[#allocation2 + $0x168] sm:$0xff] 0.0
        %317 = vst [vmem:[#allocation2 + $0x170] sm:$0xff] 0.0
        %318 = vst [vmem:[#allocation2 + $0x178] sm:$0xff] 0.0
        %319 = vst [vmem:[#allocation2 + $0x180] sm:$0xff] 0.0
        %320 = vst [vmem:[#allocation2 + $0x188] sm:$0xff] 0.0
        %321 = vst [vmem:[#allocation2 + $0x190] sm:$0xff] 0.0
        %322 = vst [vmem:[#allocation2 + $0x198] sm:$0xff] 0.0
        %323 = vst [vmem:[#allocation2 + $0x1a0] sm:$0xff] 0.0
        %324 = vst [vmem:[#allocation2 + $0x1a8] sm:$0xff] 0.0
        %325 = vst [vmem:[#allocation2 + $0x1b0] sm:$0xff] 0.0
        %326 = vst [vmem:[#allocation2 + $0x1b8] sm:$0xff] 0.0
        %327 = vst [vmem:[#allocation2 + $0x1c0] sm:$0xff] 0.0
        %328 = vst [vmem:[#allocation2 + $0x1c8] sm:$0xff] 0.0
        %329 = vst [vmem:[#allocation2 + $0x1d0] sm:$0xff] 0.0
        %330 = vst [vmem:[#allocation2 + $0x1d8] sm:$0xff] 0.0
        %331 = vst [vmem:[#allocation2 + $0x1e0] sm:$0xff] 0.0
        %332 = vst [vmem:[#allocation2 + $0x1e8] sm:$0xff] 0.0
        %333 = vst [vmem:[#allocation2 + $0x1f0] sm:$0xff] 0.0
        %334 = vst [vmem:[#allocation2 + $0x1f8] sm:$0xff] 0.0
      $region36: #{matmul_bias_act.1} parent=31 // pred_fallthru
        _
      %v335 = vld [vmem:[#allocation2] sm:$0xff]
      %v336 = vld [vmem:[#allocation2 + $0x8] sm:$0xff]
      %v337 = vld [vmem:[#allocation2 + $0x10] sm:$0xff]
      %v338 = vld [vmem:[#allocation2 + $0x18] sm:$0xff]
      %v339 = vld [vmem:[#allocation2 + $0x20] sm:$0xff]
      %v340 = vld [vmem:[#allocation2 + $0x28] sm:$0xff]
      %v341 = vld [vmem:[#allocation2 + $0x30] sm:$0xff]
      %v342 = vld [vmem:[#allocation2 + $0x38] sm:$0xff]
      %v343 = vld [vmem:[#allocation2 + $0x40] sm:$0xff]
      %v344 = vld [vmem:[#allocation2 + $0x48] sm:$0xff]
      %v345 = vld [vmem:[#allocation2 + $0x50] sm:$0xff]
      %v346 = vld [vmem:[#allocation2 + $0x58] sm:$0xff]
      %v347 = vld [vmem:[#allocation2 + $0x60] sm:$0xff]
      %v348 = vld [vmem:[#allocation2 + $0x68] sm:$0xff]
      %v349 = vld [vmem:[#allocation2 + $0x70] sm:$0xff]
      %v350 = vld [vmem:[#allocation2 + $0x78] sm:$0xff]
      %v351 = vld [vmem:[#allocation2 + $0x80] sm:$0xff]
      %v352 = vld [vmem:[#allocation2 + $0x88] sm:$0xff]
      %v353 = vld [vmem:[#allocation2 + $0x90] sm:$0xff]
      %v354 = vld [vmem:[#allocation2 + $0x98] sm:$0xff]
      %v355 = vld [vmem:[#allocation2 + $0xa0] sm:$0xff]
      %v356 = vld [vmem:[#allocation2 + $0xa8] sm:$0xff]
      %v357 = vld [vmem:[#allocation2 + $0xb0] sm:$0xff]
      %v358 = vld [vmem:[#allocation2 + $0xb8] sm:$0xff]
      %v359 = vld [vmem:[#allocation2 + $0xc0] sm:$0xff]
      %v360 = vld [vmem:[#allocation2 + $0xc8] sm:$0xff]
      %v361 = vld [vmem:[#allocation2 + $0xd0] sm:$0xff]
      %v362 = vld [vmem:[#allocation2 + $0xd8] sm:$0xff]
      %v363 = vld [vmem:[#allocation2 + $0xe0] sm:$0xff]
      %v364 = vld [vmem:[#allocation2 + $0xe8] sm:$0xff]
      %v365 = vld [vmem:[#allocation2 + $0xf0] sm:$0xff]
      %v366 = vld [vmem:[#allocation2 + $0xf8] sm:$0xff]
      %v367 = vld [vmem:[#allocation2 + $0x100] sm:$0xff]
      %v368 = vld [vmem:[#allocation2 + $0x108] sm:$0xff]
      %v369 = vld [vmem:[#allocation2 + $0x110] sm:$0xff]
      %v370 = vld [vmem:[#allocation2 + $0x118] sm:$0xff]
      %v371 = vld [vmem:[#allocation2 + $0x120] sm:$0xff]
      %v372 = vld [vmem:[#allocation2 + $0x128] sm:$0xff]
      %v373 = vld [vmem:[#allocation2 + $0x130] sm:$0xff]
      %v374 = vld [vmem:[#allocation2 + $0x138] sm:$0xff]
      %v375 = vld [vmem:[#allocation2 + $0x140] sm:$0xff]
      %v376 = vld [vmem:[#allocation2 + $0x148] sm:$0xff]
      %v377 = vld [vmem:[#allocation2 + $0x150] sm:$0xff]
      %v378 = vld [vmem:[#allocation2 + $0x158] sm:$0xff]
      %v379 = vld [vmem:[#allocation2 + $0x160] sm:$0xff]
      %v380 = vld [vmem:[#allocation2 + $0x168] sm:$0xff]
      %v381 = vld [vmem:[#allocation2 + $0x170] sm:$0xff]
      %v382 = vld [vmem:[#allocation2 + $0x178] sm:$0xff]
      %v383 = vld [vmem:[#allocation2 + $0x180] sm:$0xff]
      %v384 = vld [vmem:[#allocation2 + $0x188] sm:$0xff]
      %v385 = vld [vmem:[#allocation2 + $0x190] sm:$0xff]
      %v386 = vld [vmem:[#allocation2 + $0x198] sm:$0xff]
      %v387 = vld [vmem:[#allocation2 + $0x1a0] sm:$0xff]
      %v388 = vld [vmem:[#allocation2 + $0x1a8] sm:$0xff]
      %v389 = vld [vmem:[#allocation2 + $0x1b0] sm:$0xff]
      %v390 = vld [vmem:[#allocation2 + $0x1b8] sm:$0xff]
      %v391 = vld [vmem:[#allocation2 + $0x1c0] sm:$0xff]
      %v392 = vld [vmem:[#allocation2 + $0x1c8] sm:$0xff]
      %v393 = vld [vmem:[#allocation2 + $0x1d0] sm:$0xff]
      %v394 = vld [vmem:[#allocation2 + $0x1d8] sm:$0xff]
      %v395 = vld [vmem:[#allocation2 + $0x1e0] sm:$0xff]
      %v396 = vld [vmem:[#allocation2 + $0x1e8] sm:$0xff]
      %v397 = vld [vmem:[#allocation2 + $0x1f0] sm:$0xff]
      %v398 = vld [vmem:[#allocation2 + $0x1f8] sm:$0xff]
      %v399 = vld [vmem:[%s243] sm:$0xff]
      %v400 = vld [vmem:[%s243 + $0x8] sm:$0xff]
      %v401 = vld [vmem:[%s243 + $0x10] sm:$0xff]
      %v402 = vld [vmem:[%s243 + $0x18] sm:$0xff]
      %v403 = vld [vmem:[%s243 + $0x20] sm:$0xff]
      %v404 = vld [vmem:[%s243 + $0x28] sm:$0xff]
      %v405 = vld [vmem:[%s243 + $0x30] sm:$0xff]
      %v406 = vld [vmem:[%s243 + $0x38] sm:$0xff]
      %v407 = vld [vmem:[%s243 + $0x40] sm:$0xff]
      %v408 = vld [vmem:[%s243 + $0x48] sm:$0xff]
      %v409 = vld [vmem:[%s243 + $0x50] sm:$0xff]
      %v410 = vld [vmem:[%s243 + $0x58] sm:$0xff]
      %v411 = vld [vmem:[%s243 + $0x60] sm:$0xff]
      %v412 = vld [vmem:[%s243 + $0x68] sm:$0xff]
      %v413 = vld [vmem:[%s243 + $0x70] sm:$0xff]
      %v414 = vld [vmem:[%s243 + $0x78] sm:$0xff]
      %v415 = vld [vmem:[%s243 + $0x80] sm:$0xff]
      %v416 = vld [vmem:[%s243 + $0x88] sm:$0xff]
      %v417 = vld [vmem:[%s243 + $0x90] sm:$0xff]
      %v418 = vld [vmem:[%s243 + $0x98] sm:$0xff]
      %v419 = vld [vmem:[%s243 + $0xa0] sm:$0xff]
      %v420 = vld [vmem:[%s243 + $0xa8] sm:$0xff]
      %v421 = vld [vmem:[%s243 + $0xb0] sm:$0xff]
      %v422 = vld [vmem:[%s243 + $0xb8] sm:$0xff]
      %v423 = vld [vmem:[%s243 + $0xc0] sm:$0xff]
      %v424 = vld [vmem:[%s243 + $0xc8] sm:$0xff]
      %v425 = vld [vmem:[%s243 + $0xd0] sm:$0xff]
      %v426 = vld [vmem:[%s243 + $0xd8] sm:$0xff]
      %v427 = vld [vmem:[%s243 + $0xe0] sm:$0xff]
      %v428 = vld [vmem:[%s243 + $0xe8] sm:$0xff]
      %v429 = vld [vmem:[%s243 + $0xf0] sm:$0xff]
      %v430 = vld [vmem:[%s243 + $0xf8] sm:$0xff]
      %v431 = vld [vmem:[%s243 + $0x100] sm:$0xff]
      %v432 = vld [vmem:[%s243 + $0x108] sm:$0xff]
      %v433 = vld [vmem:[%s243 + $0x110] sm:$0xff]
      %v434 = vld [vmem:[%s243 + $0x118] sm:$0xff]
      %v435 = vld [vmem:[%s243 + $0x120] sm:$0xff]
      %v436 = vld [vmem:[%s243 + $0x128] sm:$0xff]
      %v437 = vld [vmem:[%s243 + $0x130] sm:$0xff]
      %v438 = vld [vmem:[%s243 + $0x138] sm:$0xff]
      %v439 = vld [vmem:[%s243 + $0x140] sm:$0xff]
      %v440 = vld [vmem:[%s243 + $0x148] sm:$0xff]
      %v441 = vld [vmem:[%s243 + $0x150] sm:$0xff]
      %v442 = vld [vmem:[%s243 + $0x158] sm:$0xff]
      %v443 = vld [vmem:[%s243 + $0x160] sm:$0xff]
      %v444 = vld [vmem:[%s243 + $0x168] sm:$0xff]
      %v445 = vld [vmem:[%s243 + $0x170] sm:$0xff]
      %v446 = vld [vmem:[%s243 + $0x178] sm:$0xff]
      %v447 = vld [vmem:[%s243 + $0x180] sm:$0xff]
      %v448 = vld [vmem:[%s243 + $0x188] sm:$0xff]
      %v449 = vld [vmem:[%s243 + $0x190] sm:$0xff]
      %v450 = vld [vmem:[%s243 + $0x198] sm:$0xff]
      %v451 = vld [vmem:[%s243 + $0x1a0] sm:$0xff]
      %v452 = vld [vmem:[%s243 + $0x1a8] sm:$0xff]
      %v453 = vld [vmem:[%s243 + $0x1b0] sm:$0xff]
      %v454 = vld [vmem:[%s243 + $0x1b8] sm:$0xff]
      %v455 = vld [vmem:[%s243 + $0x1c0] sm:$0xff]
      %v456 = vld [vmem:[%s243 + $0x1c8] sm:$0xff]
      %v457 = vld [vmem:[%s243 + $0x1d0] sm:$0xff]
      %v458 = vld [vmem:[%s243 + $0x1d8] sm:$0xff]
      %v459 = vld [vmem:[%s243 + $0x1e0] sm:$0xff]
      %v460 = vld [vmem:[%s243 + $0x1e8] sm:$0xff]
      %v461 = vld [vmem:[%s243 + $0x1f0] sm:$0xff]
      %v462 = vld [vmem:[%s243 + $0x1f8] sm:$0xff]
      %v463 = vld [vmem:[%s253] sm:$0xf]
      %v464 = vld [vmem:[%s253 + $0x4] sm:$0xf]
      %v465 = vld [vmem:[%s253 + $0x8] sm:$0xf]
      %v466 = vld [vmem:[%s253 + $0xc] sm:$0xf]
      %v467 = vld [vmem:[%s253 + $0x10] sm:$0xf]
      %v468 = vld [vmem:[%s253 + $0x14] sm:$0xf]
      %v469 = vld [vmem:[%s253 + $0x18] sm:$0xf]
      %v470 = vld [vmem:[%s253 + $0x1c] sm:$0xf]
      %v471 = vld [vmem:[%s253 + $0x20] sm:$0xf]
      %v472 = vld [vmem:[%s253 + $0x24] sm:$0xf]
      %v473 = vld [vmem:[%s253 + $0x28] sm:$0xf]
      %v474 = vld [vmem:[%s253 + $0x2c] sm:$0xf]
      %v475 = vld [vmem:[%s253 + $0x30] sm:$0xf]
      %v476 = vld [vmem:[%s253 + $0x34] sm:$0xf]
      %v477 = vld [vmem:[%s253 + $0x38] sm:$0xf]
      %v478 = vld [vmem:[%s253 + $0x3c] sm:$0xf]
      %v479 = vld [vmem:[%s253 + $0x40] sm:$0xf]
      %v480 = vld [vmem:[%s253 + $0x44] sm:$0xf]
      %v481 = vld [vmem:[%s253 + $0x48] sm:$0xf]
      %v482 = vld [vmem:[%s253 + $0x4c] sm:$0xf]
      %v483 = vld [vmem:[%s253 + $0x50] sm:$0xf]
      %v484 = vld [vmem:[%s253 + $0x54] sm:$0xf]
      %v485 = vld [vmem:[%s253 + $0x58] sm:$0xf]
      %v486 = vld [vmem:[%s253 + $0x5c] sm:$0xf]
      %v487 = vld [vmem:[%s253 + $0x60] sm:$0xf]
      %v488 = vld [vmem:[%s253 + $0x64] sm:$0xf]
      %v489 = vld [vmem:[%s253 + $0x68] sm:$0xf]
      %v490 = vld [vmem:[%s253 + $0x6c] sm:$0xf]
      %v491 = vld [vmem:[%s253 + $0x70] sm:$0xf]
      %v492 = vld [vmem:[%s253 + $0x74] sm:$0xf]
      %v493 = vld [vmem:[%s253 + $0x78] sm:$0xf]
      %v494 = vld [vmem:[%s253 + $0x7c] sm:$0xf]
      %v559 = vunpack.c.l.b16 %v399
      %v560 = vunpack.c.h.b16 %v399
      %v561 = vunpack.c.l.b16 %v400
      %v562 = vunpack.c.h.b16 %v400
      %v563 = vunpack.c.l.b16 %v401
      %v564 = vunpack.c.h.b16 %v401
      %v565 = vunpack.c.l.b16 %v402
      %v566 = vunpack.c.h.b16 %v402
      %v567 = vunpack.c.l.b16 %v403
      %v568 = vunpack.c.h.b16 %v403
      %v569 = vunpack.c.l.b16 %v404
      %v570 = vunpack.c.h.b16 %v404
      %v571 = vunpack.c.l.b16 %v405
      %v572 = vunpack.c.h.b16 %v405
      %v573 = vunpack.c.l.b16 %v406
      %v574 = vunpack.c.h.b16 %v406
      %v575 = vunpack.c.l.b16 %v407
      %v576 = vunpack.c.h.b16 %v407
      %v577 = vunpack.c.l.b16 %v408
      %v578 = vunpack.c.h.b16 %v408
      %v579 = vunpack.c.l.b16 %v409
      %v580 = vunpack.c.h.b16 %v409
      %v581 = vunpack.c.l.b16 %v410
      %v582 = vunpack.c.h.b16 %v410
      %v583 = vunpack.c.l.b16 %v411
      %v584 = vunpack.c.h.b16 %v411
      %v585 = vunpack.c.l.b16 %v412
      %v586 = vunpack.c.h.b16 %v412
      %v587 = vunpack.c.l.b16 %v413
      %v588 = vunpack.c.h.b16 %v413
      %v589 = vunpack.c.l.b16 %v414
      %v590 = vunpack.c.h.b16 %v414
      %v591 = vunpack.c.l.b16 %v415
      %v592 = vunpack.c.h.b16 %v415
      %v593 = vunpack.c.l.b16 %v416
      %v594 = vunpack.c.h.b16 %v416
      %v595 = vunpack.c.l.b16 %v417
      %v596 = vunpack.c.h.b16 %v417
      %v597 = vunpack.c.l.b16 %v418
      %v598 = vunpack.c.h.b16 %v418
      %v599 = vunpack.c.l.b16 %v419
      %v600 = vunpack.c.h.b16 %v419
      %v601 = vunpack.c.l.b16 %v420
      %v602 = vunpack.c.h.b16 %v420
      %v603 = vunpack.c.l.b16 %v421
      %v604 = vunpack.c.h.b16 %v421
      %v605 = vunpack.c.l.b16 %v422
      %v606 = vunpack.c.h.b16 %v422
      %v607 = vunpack.c.l.b16 %v423
      %v608 = vunpack.c.h.b16 %v423
      %v609 = vunpack.c.l.b16 %v424
      %v610 = vunpack.c.h.b16 %v424
      %v611 = vunpack.c.l.b16 %v425
      %v612 = vunpack.c.h.b16 %v425
      %v613 = vunpack.c.l.b16 %v426
      %v614 = vunpack.c.h.b16 %v426
      %v615 = vunpack.c.l.b16 %v427
      %v616 = vunpack.c.h.b16 %v427
      %v617 = vunpack.c.l.b16 %v428
      %v618 = vunpack.c.h.b16 %v428
      %v619 = vunpack.c.l.b16 %v429
      %v620 = vunpack.c.h.b16 %v429
      %v621 = vunpack.c.l.b16 %v430
      %v622 = vunpack.c.h.b16 %v430
      %v623 = vunpack.c.l.b16 %v431
      %v624 = vunpack.c.h.b16 %v431
      %v625 = vunpack.c.l.b16 %v432
      %v626 = vunpack.c.h.b16 %v432
      %v627 = vunpack.c.l.b16 %v433
      %v628 = vunpack.c.h.b16 %v433
      %v629 = vunpack.c.l.b16 %v434
      %v630 = vunpack.c.h.b16 %v434
      %v631 = vunpack.c.l.b16 %v435
      %v632 = vunpack.c.h.b16 %v435
      %v633 = vunpack.c.l.b16 %v436
      %v634 = vunpack.c.h.b16 %v436
      %v635 = vunpack.c.l.b16 %v437
      %v636 = vunpack.c.h.b16 %v437
      %v637 = vunpack.c.l.b16 %v438
      %v638 = vunpack.c.h.b16 %v438
      %v639 = vunpack.c.l.b16 %v439
      %v640 = vunpack.c.h.b16 %v439
      %v641 = vunpack.c.l.b16 %v440
      %v642 = vunpack.c.h.b16 %v440
      %v643 = vunpack.c.l.b16 %v441
      %v644 = vunpack.c.h.b16 %v441
      %v645 = vunpack.c.l.b16 %v442
      %v646 = vunpack.c.h.b16 %v442
      %v647 = vunpack.c.l.b16 %v443
      %v648 = vunpack.c.h.b16 %v443
      %v649 = vunpack.c.l.b16 %v444
      %v650 = vunpack.c.h.b16 %v444
      %v651 = vunpack.c.l.b16 %v445
      %v652 = vunpack.c.h.b16 %v445
      %v653 = vunpack.c.l.b16 %v446
      %v654 = vunpack.c.h.b16 %v446
      %v655 = vunpack.c.l.b16 %v447
      %v656 = vunpack.c.h.b16 %v447
      %v657 = vunpack.c.l.b16 %v448
      %v658 = vunpack.c.h.b16 %v448
      %v659 = vunpack.c.l.b16 %v449
      %v660 = vunpack.c.h.b16 %v449
      %v661 = vunpack.c.l.b16 %v450
      %v662 = vunpack.c.h.b16 %v450
      %v663 = vunpack.c.l.b16 %v451
      %v664 = vunpack.c.h.b16 %v451
      %v665 = vunpack.c.l.b16 %v452
      %v666 = vunpack.c.h.b16 %v452
      %v667 = vunpack.c.l.b16 %v453
      %v668 = vunpack.c.h.b16 %v453
      %v669 = vunpack.c.l.b16 %v454
      %v670 = vunpack.c.h.b16 %v454
      %v671 = vunpack.c.l.b16 %v455
      %v672 = vunpack.c.h.b16 %v455
      %v673 = vunpack.c.l.b16 %v456
      %v674 = vunpack.c.h.b16 %v456
      %v675 = vunpack.c.l.b16 %v457
      %v676 = vunpack.c.h.b16 %v457
      %v677 = vunpack.c.l.b16 %v458
      %v678 = vunpack.c.h.b16 %v458
      %v679 = vunpack.c.l.b16 %v459
      %v680 = vunpack.c.h.b16 %v459
      %v681 = vunpack.c.l.b16 %v460
      %v682 = vunpack.c.h.b16 %v460
      %v683 = vunpack.c.l.b16 %v461
      %v684 = vunpack.c.h.b16 %v461
      %v685 = vunpack.c.l.b16 %v462
      %v686 = vunpack.c.h.b16 %v462
      %v687 = vpack.c.b16 %v561, %v559
      %v688 = vpack.c.b16 %v562, %v560
      %v689 = vpack.c.b16 %v565, %v563
      %v690 = vpack.c.b16 %v566, %v564
      %v691 = vpack.c.b16 %v569, %v567
      %v692 = vpack.c.b16 %v570, %v568
      %v693 = vpack.c.b16 %v573, %v571
      %v694 = vpack.c.b16 %v574, %v572
      %v695 = vpack.c.b16 %v577, %v575
      %v696 = vpack.c.b16 %v578, %v576
      %v697 = vpack.c.b16 %v581, %v579
      %v698 = vpack.c.b16 %v582, %v580
      %v699 = vpack.c.b16 %v585, %v583
      %v700 = vpack.c.b16 %v586, %v584
      %v701 = vpack.c.b16 %v589, %v587
      %v702 = vpack.c.b16 %v590, %v588
      %v703 = vpack.c.b16 %v593, %v591
      %v704 = vpack.c.b16 %v594, %v592
      %v705 = vpack.c.b16 %v597, %v595
      %v706 = vpack.c.b16 %v598, %v596
      %v707 = vpack.c.b16 %v601, %v599
      %v708 = vpack.c.b16 %v602, %v600
      %v709 = vpack.c.b16 %v605, %v603
      %v710 = vpack.c.b16 %v606, %v604
      %v711 = vpack.c.b16 %v609, %v607
      %v712 = vpack.c.b16 %v610, %v608
      %v713 = vpack.c.b16 %v613, %v611
      %v714 = vpack.c.b16 %v614, %v612
      %v715 = vpack.c.b16 %v617, %v615
      %v716 = vpack.c.b16 %v618, %v616
      %v717 = vpack.c.b16 %v621, %v619
      %v718 = vpack.c.b16 %v622, %v620
      %v719 = vpack.c.b16 %v625, %v623
      %v720 = vpack.c.b16 %v626, %v624
      %v721 = vpack.c.b16 %v629, %v627
      %v722 = vpack.c.b16 %v630, %v628
      %v723 = vpack.c.b16 %v633, %v631
      %v724 = vpack.c.b16 %v634, %v632
      %v725 = vpack.c.b16 %v637, %v635
      %v726 = vpack.c.b16 %v638, %v636
      %v727 = vpack.c.b16 %v641, %v639
      %v728 = vpack.c.b16 %v642, %v640
      %v729 = vpack.c.b16 %v645, %v643
      %v730 = vpack.c.b16 %v646, %v644
      %v731 = vpack.c.b16 %v649, %v647
      %v732 = vpack.c.b16 %v650, %v648
      %v733 = vpack.c.b16 %v653, %v651
      %v734 = vpack.c.b16 %v654, %v652
      %v735 = vpack.c.b16 %v657, %v655
      %v736 = vpack.c.b16 %v658, %v656
      %v737 = vpack.c.b16 %v661, %v659
      %v738 = vpack.c.b16 %v662, %v660
      %v739 = vpack.c.b16 %v665, %v663
      %v740 = vpack.c.b16 %v666, %v664
      %v741 = vpack.c.b16 %v669, %v667
      %v742 = vpack.c.b16 %v670, %v668
      %v743 = vpack.c.b16 %v673, %v671
      %v744 = vpack.c.b16 %v674, %v672
      %v745 = vpack.c.b16 %v677, %v675
      %v746 = vpack.c.b16 %v678, %v676
      %v747 = vpack.c.b16 %v681, %v679
      %v748 = vpack.c.b16 %v682, %v680
      %v749 = vpack.c.b16 %v685, %v683
      %v750 = vpack.c.b16 %v686, %v684
      %v847 = vunpack.c.l.b16 %v463
      %v848 = vunpack.c.l.b16 %v464
      %v849 = vunpack.c.l.b16 %v465
      %v850 = vunpack.c.l.b16 %v466
      %v851 = vunpack.c.l.b16 %v467
      %v852 = vunpack.c.l.b16 %v468
      %v853 = vunpack.c.l.b16 %v469
      %v854 = vunpack.c.l.b16 %v470
      %v855 = vunpack.c.l.b16 %v471
      %v856 = vunpack.c.l.b16 %v472
      %v857 = vunpack.c.l.b16 %v473
      %v858 = vunpack.c.l.b16 %v474
      %v859 = vunpack.c.l.b16 %v475
      %v860 = vunpack.c.l.b16 %v476
      %v861 = vunpack.c.l.b16 %v477
      %v862 = vunpack.c.l.b16 %v478
      %v863 = vunpack.c.l.b16 %v479
      %v864 = vunpack.c.l.b16 %v480
      %v865 = vunpack.c.l.b16 %v481
      %v866 = vunpack.c.l.b16 %v482
      %v867 = vunpack.c.l.b16 %v483
      %v868 = vunpack.c.l.b16 %v484
      %v869 = vunpack.c.l.b16 %v485
      %v870 = vunpack.c.l.b16 %v486
      %v871 = vunpack.c.l.b16 %v487
      %v872 = vunpack.c.l.b16 %v488
      %v873 = vunpack.c.l.b16 %v489
      %v874 = vunpack.c.l.b16 %v490
      %v875 = vunpack.c.l.b16 %v491
      %v876 = vunpack.c.l.b16 %v492
      %v877 = vunpack.c.l.b16 %v493
      %v878 = vunpack.c.l.b16 %v494
      %v879 = vpack.c.b16 %v848, %v847
      %v880 = vpack.c.b16 %v850, %v849
      %v881 = vpack.c.b16 %v852, %v851
      %v882 = vpack.c.b16 %v854, %v853
      %v883 = vpack.c.b16 %v856, %v855
      %v884 = vpack.c.b16 %v858, %v857
      %v885 = vpack.c.b16 %v860, %v859
      %v886 = vpack.c.b16 %v862, %v861
      %v887 = vpack.c.b16 %v864, %v863
      %v888 = vpack.c.b16 %v866, %v865
      %v889 = vpack.c.b16 %v868, %v867
      %v890 = vpack.c.b16 %v870, %v869
      %v891 = vpack.c.b16 %v872, %v871
      %v892 = vpack.c.b16 %v874, %v873
      %v893 = vpack.c.b16 %v876, %v875
      %v894 = vpack.c.b16 %v878, %v877
      %911 = vmatpush.bf16.msra.mxu0 %v886
      %912 = vmatpush.bf16.msra.mxu0 %v885
      %913 = vmatpush.bf16.msra.mxu0 %v884
      %914 = vmatpush.bf16.msra.mxu0 %v883
      %915 = vmatpush.bf16.msra.mxu0 %v882
      %916 = vmatpush.bf16.msra.mxu0 %v881
      %917 = vmatpush.bf16.msra.mxu0 %v880
      %918 = vmatpush.bf16.msra.mxu0 %v879
      %919 = vmatmul.bf16.gmra.mxu0 %v687
      %v920 = vpop.f32.mrf.mxu0
      %v921 = vadd.f32 0.0, %v920
      %v922 = vpop.f32.mrf.mxu0
      %v923 = vadd.f32 0.0, %v922
      %924 = vmatmul.bf16.gmra.mxu0 %v689
      %v925 = vpop.f32.mrf.mxu0
      %v926 = vadd.f32 0.0, %v925
      %v927 = vpop.f32.mrf.mxu0
      %v928 = vadd.f32 0.0, %v927
      %929 = vmatmul.bf16.gmra.mxu0 %v691
      %v930 = vpop.f32.mrf.mxu0
      %v931 = vadd.f32 0.0, %v930
      %v932 = vpop.f32.mrf.mxu0
      %v933 = vadd.f32 0.0, %v932
      %934 = vmatmul.bf16.gmra.mxu0 %v693
      %v935 = vpop.f32.mrf.mxu0
      %v936 = vadd.f32 0.0, %v935
      %v937 = vpop.f32.mrf.mxu0
      %v938 = vadd.f32 0.0, %v937
      %939 = vmatmul.bf16.gmra.mxu0 %v695
      %v940 = vpop.f32.mrf.mxu0
      %v941 = vadd.f32 0.0, %v940
      %v942 = vpop.f32.mrf.mxu0
      %v943 = vadd.f32 0.0, %v942
      %944 = vmatmul.bf16.gmra.mxu0 %v697
      %v945 = vpop.f32.mrf.mxu0
      %v946 = vadd.f32 0.0, %v945
      %v947 = vpop.f32.mrf.mxu0
      %v948 = vadd.f32 0.0, %v947
      %949 = vmatmul.bf16.gmra.mxu0 %v699
      %v950 = vpop.f32.mrf.mxu0
      %v951 = vadd.f32 0.0, %v950
      %v952 = vpop.f32.mrf.mxu0
      %v953 = vadd.f32 0.0, %v952
      %954 = vmatmul.bf16.gmra.mxu0 %v701
      %v955 = vpop.f32.mrf.mxu0
      %v956 = vadd.f32 0.0, %v955
      %v957 = vpop.f32.mrf.mxu0
      %v958 = vadd.f32 0.0, %v957
      %959 = vmatmul.bf16.gmra.mxu0 %v703
      %v960 = vpop.f32.mrf.mxu0
      %v961 = vadd.f32 0.0, %v960
      %v962 = vpop.f32.mrf.mxu0
      %v963 = vadd.f32 0.0, %v962
      %964 = vmatmul.bf16.gmra.mxu0 %v705
      %v965 = vpop.f32.mrf.mxu0
      %v966 = vadd.f32 0.0, %v965
      %v967 = vpop.f32.mrf.mxu0
      %v968 = vadd.f32 0.0, %v967
      %969 = vmatmul.bf16.gmra.mxu0 %v707
      %v970 = vpop.f32.mrf.mxu0
      %v971 = vadd.f32 0.0, %v970
      %v972 = vpop.f32.mrf.mxu0
      %v973 = vadd.f32 0.0, %v972
      %974 = vmatmul.bf16.gmra.mxu0 %v709
      %v975 = vpop.f32.mrf.mxu0
      %v976 = vadd.f32 0.0, %v975
      %v977 = vpop.f32.mrf.mxu0
      %v978 = vadd.f32 0.0, %v977
      %979 = vmatmul.bf16.gmra.mxu0 %v711
      %v980 = vpop.f32.mrf.mxu0
      %v981 = vadd.f32 0.0, %v980
      %v982 = vpop.f32.mrf.mxu0
      %v983 = vadd.f32 0.0, %v982
      %984 = vmatmul.bf16.gmra.mxu0 %v713
      %v985 = vpop.f32.mrf.mxu0
      %v986 = vadd.f32 0.0, %v985
      %v987 = vpop.f32.mrf.mxu0
      %v988 = vadd.f32 0.0, %v987
      %989 = vmatmul.bf16.gmra.mxu0 %v715
      %v990 = vpop.f32.mrf.mxu0
      %v991 = vadd.f32 0.0, %v990
      %v992 = vpop.f32.mrf.mxu0
      %v993 = vadd.f32 0.0, %v992
      %994 = vmatmul.bf16.gmra.mxu0 %v717
      %v995 = vpop.f32.mrf.mxu0
      %v996 = vadd.f32 0.0, %v995
      %v997 = vpop.f32.mrf.mxu0
      %v998 = vadd.f32 0.0, %v997
      %999 = vmatmul.bf16.gmra.mxu0 %v719
      %v1000 = vpop.f32.mrf.mxu0
      %v1001 = vadd.f32 0.0, %v1000
      %v1002 = vpop.f32.mrf.mxu0
      %v1003 = vadd.f32 0.0, %v1002
      %1004 = vmatmul.bf16.gmra.mxu0 %v721
      %v1005 = vpop.f32.mrf.mxu0
      %v1006 = vadd.f32 0.0, %v1005
      %v1007 = vpop.f32.mrf.mxu0
      %v1008 = vadd.f32 0.0, %v1007
      %1009 = vmatmul.bf16.gmra.mxu0 %v723
      %v1010 = vpop.f32.mrf.mxu0
      %v1011 = vadd.f32 0.0, %v1010
      %v1012 = vpop.f32.mrf.mxu0
      %v1013 = vadd.f32 0.0, %v1012
      %1014 = vmatmul.bf16.gmra.mxu0 %v725
      %v1015 = vpop.f32.mrf.mxu0
      %v1016 = vadd.f32 0.0, %v1015
      %v1017 = vpop.f32.mrf.mxu0
      %v1018 = vadd.f32 0.0, %v1017
      %1019 = vmatmul.bf16.gmra.mxu0 %v727
      %v1020 = vpop.f32.mrf.mxu0
      %v1021 = vadd.f32 0.0, %v1020
      %v1022 = vpop.f32.mrf.mxu0
      %v1023 = vadd.f32 0.0, %v1022
      %1024 = vmatmul.bf16.gmra.mxu0 %v729
      %v1025 = vpop.f32.mrf.mxu0
      %v1026 = vadd.f32 0.0, %v1025
      %v1027 = vpop.f32.mrf.mxu0
      %v1028 = vadd.f32 0.0, %v1027
      %1029 = vmatmul.bf16.gmra.mxu0 %v731
      %v1030 = vpop.f32.mrf.mxu0
      %v1031 = vadd.f32 0.0, %v1030
      %v1032 = vpop.f32.mrf.mxu0
      %v1033 = vadd.f32 0.0, %v1032
      %1034 = vmatmul.bf16.gmra.mxu0 %v733
      %v1035 = vpop.f32.mrf.mxu0
      %v1036 = vadd.f32 0.0, %v1035
      %v1037 = vpop.f32.mrf.mxu0
      %v1038 = vadd.f32 0.0, %v1037
      %1039 = vmatmul.bf16.gmra.mxu0 %v735
      %v1040 = vpop.f32.mrf.mxu0
      %v1041 = vadd.f32 0.0, %v1040
      %v1042 = vpop.f32.mrf.mxu0
      %v1043 = vadd.f32 0.0, %v1042
      %1044 = vmatmul.bf16.gmra.mxu0 %v737
      %v1045 = vpop.f32.mrf.mxu0
      %v1046 = vadd.f32 0.0, %v1045
      %v1047 = vpop.f32.mrf.mxu0
      %v1048 = vadd.f32 0.0, %v1047
      %1049 = vmatmul.bf16.gmra.mxu0 %v739
      %v1050 = vpop.f32.mrf.mxu0
      %v1051 = vadd.f32 0.0, %v1050
      %v1052 = vpop.f32.mrf.mxu0
      %v1053 = vadd.f32 0.0, %v1052
      %1054 = vmatmul.bf16.gmra.mxu0 %v741
      %v1055 = vpop.f32.mrf.mxu0
      %v1056 = vadd.f32 0.0, %v1055
      %v1057 = vpop.f32.mrf.mxu0
      %v1058 = vadd.f32 0.0, %v1057
      %1059 = vmatmul.bf16.gmra.mxu0 %v743
      %v1060 = vpop.f32.mrf.mxu0
      %v1061 = vadd.f32 0.0, %v1060
      %v1062 = vpop.f32.mrf.mxu0
      %v1063 = vadd.f32 0.0, %v1062
      %1064 = vmatmul.bf16.gmra.mxu0 %v745
      %v1065 = vpop.f32.mrf.mxu0
      %v1066 = vadd.f32 0.0, %v1065
      %v1067 = vpop.f32.mrf.mxu0
      %v1068 = vadd.f32 0.0, %v1067
      %1069 = vmatmul.bf16.gmra.mxu0 %v747
      %v1070 = vpop.f32.mrf.mxu0
      %v1071 = vadd.f32 0.0, %v1070
      %v1072 = vpop.f32.mrf.mxu0
      %v1073 = vadd.f32 0.0, %v1072
      %1074 = vmatmul.bf16.gmra.mxu0 %v749
      %v1075 = vpop.f32.mrf.mxu0
      %v1076 = vadd.f32 0.0, %v1075
      %v1077 = vpop.f32.mrf.mxu0
      %v1078 = vadd.f32 0.0, %v1077
      %1079 = vdwg.mxu0
      %1080 = vmatpush.bf16.msra.mxu0 %v894
      %1081 = vmatpush.bf16.msra.mxu0 %v893
      %1082 = vmatpush.bf16.msra.mxu0 %v892
      %1083 = vmatpush.bf16.msra.mxu0 %v891
      %1084 = vmatpush.bf16.msra.mxu0 %v890
      %1085 = vmatpush.bf16.msra.mxu0 %v889
      %1086 = vmatpush.bf16.msra.mxu0 %v888
      %1087 = vmatpush.bf16.msra.mxu0 %v887
      %1088 = vmatmul.bf16.gmra.mxu0 %v688
      %v1089 = vpop.f32.mrf.mxu0
      %v1090 = vadd.f32 %v921, %v1089
      %v1091 = vpop.f32.mrf.mxu0
      %v1092 = vadd.f32 %v923, %v1091
      %1093 = vmatmul.bf16.gmra.mxu0 %v690
      %v1094 = vpop.f32.mrf.mxu0
      %v1095 = vadd.f32 %v926, %v1094
      %v1096 = vpop.f32.mrf.mxu0
      %v1097 = vadd.f32 %v928, %v1096
      %1098 = vmatmul.bf16.gmra.mxu0 %v692
      %v1099 = vpop.f32.mrf.mxu0
      %v1100 = vadd.f32 %v931, %v1099
      %v1101 = vpop.f32.mrf.mxu0
      %v1102 = vadd.f32 %v933, %v1101
      %1103 = vmatmul.bf16.gmra.mxu0 %v694
      %v1104 = vpop.f32.mrf.mxu0
      %v1105 = vadd.f32 %v936, %v1104
      %v1106 = vpop.f32.mrf.mxu0
      %v1107 = vadd.f32 %v938, %v1106
      %1108 = vmatmul.bf16.gmra.mxu0 %v696
      %v1109 = vpop.f32.mrf.mxu0
      %v1110 = vadd.f32 %v941, %v1109
      %v1111 = vpop.f32.mrf.mxu0
      %v1112 = vadd.f32 %v943, %v1111
      %1113 = vmatmul.bf16.gmra.mxu0 %v698
      %v1114 = vpop.f32.mrf.mxu0
      %v1115 = vadd.f32 %v946, %v1114
      %v1116 = vpop.f32.mrf.mxu0
      %v1117 = vadd.f32 %v948, %v1116
      %1118 = vmatmul.bf16.gmra.mxu0 %v700
      %v1119 = vpop.f32.mrf.mxu0
      %v1120 = vadd.f32 %v951, %v1119
      %v1121 = vpop.f32.mrf.mxu0
      %v1122 = vadd.f32 %v953, %v1121
      %1123 = vmatmul.bf16.gmra.mxu0 %v702
      %v1124 = vpop.f32.mrf.mxu0
      %v1125 = vadd.f32 %v956, %v1124
      %v1126 = vpop.f32.mrf.mxu0
      %v1127 = vadd.f32 %v958, %v1126
      %1128 = vmatmul.bf16.gmra.mxu0 %v704
      %v1129 = vpop.f32.mrf.mxu0
      %v1130 = vadd.f32 %v961, %v1129
      %v1131 = vpop.f32.mrf.mxu0
      %v1132 = vadd.f32 %v963, %v1131
      %1133 = vmatmul.bf16.gmra.mxu0 %v706
      %v1134 = vpop.f32.mrf.mxu0
      %v1135 = vadd.f32 %v966, %v1134
      %v1136 = vpop.f32.mrf.mxu0
      %v1137 = vadd.f32 %v968, %v1136
      %1138 = vmatmul.bf16.gmra.mxu0 %v708
      %v1139 = vpop.f32.mrf.mxu0
      %v1140 = vadd.f32 %v971, %v1139
      %v1141 = vpop.f32.mrf.mxu0
      %v1142 = vadd.f32 %v973, %v1141
      %1143 = vmatmul.bf16.gmra.mxu0 %v710
      %v1144 = vpop.f32.mrf.mxu0
      %v1145 = vadd.f32 %v976, %v1144
      %v1146 = vpop.f32.mrf.mxu0
      %v1147 = vadd.f32 %v978, %v1146
      %1148 = vmatmul.bf16.gmra.mxu0 %v712
      %v1149 = vpop.f32.mrf.mxu0
      %v1150 = vadd.f32 %v981, %v1149
      %v1151 = vpop.f32.mrf.mxu0
      %v1152 = vadd.f32 %v983, %v1151
      %1153 = vmatmul.bf16.gmra.mxu0 %v714
      %v1154 = vpop.f32.mrf.mxu0
      %v1155 = vadd.f32 %v986, %v1154
      %v1156 = vpop.f32.mrf.mxu0
      %v1157 = vadd.f32 %v988, %v1156
      %1158 = vmatmul.bf16.gmra.mxu0 %v716
      %v1159 = vpop.f32.mrf.mxu0
      %v1160 = vadd.f32 %v991, %v1159
      %v1161 = vpop.f32.mrf.mxu0
      %v1162 = vadd.f32 %v993, %v1161
      %1163 = vmatmul.bf16.gmra.mxu0 %v718
      %v1164 = vpop.f32.mrf.mxu0
      %v1165 = vadd.f32 %v996, %v1164
      %v1166 = vpop.f32.mrf.mxu0
      %v1167 = vadd.f32 %v998, %v1166
      %1168 = vmatmul.bf16.gmra.mxu0 %v720
      %v1169 = vpop.f32.mrf.mxu0
      %v1170 = vadd.f32 %v1001, %v1169
      %v1171 = vpop.f32.mrf.mxu0
      %v1172 = vadd.f32 %v1003, %v1171
      %1173 = vmatmul.bf16.gmra.mxu0 %v722
      %v1174 = vpop.f32.mrf.mxu0
      %v1175 = vadd.f32 %v1006, %v1174
      %v1176 = vpop.f32.mrf.mxu0
      %v1177 = vadd.f32 %v1008, %v1176
      %1178 = vmatmul.bf16.gmra.mxu0 %v724
      %v1179 = vpop.f32.mrf.mxu0
      %v1180 = vadd.f32 %v1011, %v1179
      %v1181 = vpop.f32.mrf.mxu0
      %v1182 = vadd.f32 %v1013, %v1181
      %1183 = vmatmul.bf16.gmra.mxu0 %v726
      %v1184 = vpop.f32.mrf.mxu0
      %v1185 = vadd.f32 %v1016, %v1184
      %v1186 = vpop.f32.mrf.mxu0
      %v1187 = vadd.f32 %v1018, %v1186
      %1188 = vmatmul.bf16.gmra.mxu0 %v728
      %v1189 = vpop.f32.mrf.mxu0
      %v1190 = vadd.f32 %v1021, %v1189
      %v1191 = vpop.f32.mrf.mxu0
      %v1192 = vadd.f32 %v1023, %v1191
      %1193 = vmatmul.bf16.gmra.mxu0 %v730
      %v1194 = vpop.f32.mrf.mxu0
      %v1195 = vadd.f32 %v1026, %v1194
      %v1196 = vpop.f32.mrf.mxu0
      %v1197 = vadd.f32 %v1028, %v1196
      %1198 = vmatmul.bf16.gmra.mxu0 %v732
      %v1199 = vpop.f32.mrf.mxu0
      %v1200 = vadd.f32 %v1031, %v1199
      %v1201 = vpop.f32.mrf.mxu0
      %v1202 = vadd.f32 %v1033, %v1201
      %1203 = vmatmul.bf16.gmra.mxu0 %v734
      %v1204 = vpop.f32.mrf.mxu0
      %v1205 = vadd.f32 %v1036, %v1204
      %v1206 = vpop.f32.mrf.mxu0
      %v1207 = vadd.f32 %v1038, %v1206
      %1208 = vmatmul.bf16.gmra.mxu0 %v736
      %v1209 = vpop.f32.mrf.mxu0
      %v1210 = vadd.f32 %v1041, %v1209
      %v1211 = vpop.f32.mrf.mxu0
      %v1212 = vadd.f32 %v1043, %v1211
      %1213 = vmatmul.bf16.gmra.mxu0 %v738
      %v1214 = vpop.f32.mrf.mxu0
      %v1215 = vadd.f32 %v1046, %v1214
      %v1216 = vpop.f32.mrf.mxu0
      %v1217 = vadd.f32 %v1048, %v1216
      %1218 = vmatmul.bf16.gmra.mxu0 %v740
      %v1219 = vpop.f32.mrf.mxu0
      %v1220 = vadd.f32 %v1051, %v1219
      %v1221 = vpop.f32.mrf.mxu0
      %v1222 = vadd.f32 %v1053, %v1221
      %1223 = vmatmul.bf16.gmra.mxu0 %v742
      %v1224 = vpop.f32.mrf.mxu0
      %v1225 = vadd.f32 %v1056, %v1224
      %v1226 = vpop.f32.mrf.mxu0
      %v1227 = vadd.f32 %v1058, %v1226
      %1228 = vmatmul.bf16.gmra.mxu0 %v744
      %v1229 = vpop.f32.mrf.mxu0
      %v1230 = vadd.f32 %v1061, %v1229
      %v1231 = vpop.f32.mrf.mxu0
      %v1232 = vadd.f32 %v1063, %v1231
      %1233 = vmatmul.bf16.gmra.mxu0 %v746
      %v1234 = vpop.f32.mrf.mxu0
      %v1235 = vadd.f32 %v1066, %v1234
      %v1236 = vpop.f32.mrf.mxu0
      %v1237 = vadd.f32 %v1068, %v1236
      %1238 = vmatmul.bf16.gmra.mxu0 %v748
      %v1239 = vpop.f32.mrf.mxu0
      %v1240 = vadd.f32 %v1071, %v1239
      %v1241 = vpop.f32.mrf.mxu0
      %v1242 = vadd.f32 %v1073, %v1241
      %1243 = vmatmul.bf16.gmra.mxu0 %v750
      %v1244 = vpop.f32.mrf.mxu0
      %v1245 = vadd.f32 %v1076, %v1244
      %v1246 = vpop.f32.mrf.mxu0
      %v1247 = vadd.f32 %v1078, %v1246
      %1248 = vdwg.mxu0
      %v1249 = vadd.f32 %v335, %v1090
      %v1250 = vadd.f32 %v336, %v1092
      %v1251 = vadd.f32 %v337, %v1095
      %v1252 = vadd.f32 %v338, %v1097
      %v1253 = vadd.f32 %v339, %v1100
      %v1254 = vadd.f32 %v340, %v1102
      %v1255 = vadd.f32 %v341, %v1105
      %v1256 = vadd.f32 %v342, %v1107
      %v1257 = vadd.f32 %v343, %v1110
      %v1258 = vadd.f32 %v344, %v1112
      %v1259 = vadd.f32 %v345, %v1115
      %v1260 = vadd.f32 %v346, %v1117
      %v1261 = vadd.f32 %v347, %v1120
      %v1262 = vadd.f32 %v348, %v1122
      %v1263 = vadd.f32 %v349, %v1125
      %v1264 = vadd.f32 %v350, %v1127
      %v1265 = vadd.f32 %v351, %v1130
      %v1266 = vadd.f32 %v352, %v1132
      %v1267 = vadd.f32 %v353, %v1135
      %v1268 = vadd.f32 %v354, %v1137
      %v1269 = vadd.f32 %v355, %v1140
      %v1270 = vadd.f32 %v356, %v1142
      %v1271 = vadd.f32 %v357, %v1145
      %v1272 = vadd.f32 %v358, %v1147
      %v1273 = vadd.f32 %v359, %v1150
      %v1274 = vadd.f32 %v360, %v1152
      %v1275 = vadd.f32 %v361, %v1155
      %v1276 = vadd.f32 %v362, %v1157
      %v1277 = vadd.f32 %v363, %v1160
      %v1278 = vadd.f32 %v364, %v1162
      %v1279 = vadd.f32 %v365, %v1165
      %v1280 = vadd.f32 %v366, %v1167
      %v1281 = vadd.f32 %v367, %v1170
      %v1282 = vadd.f32 %v368, %v1172
      %v1283 = vadd.f32 %v369, %v1175
      %v1284 = vadd.f32 %v370, %v1177
      %v1285 = vadd.f32 %v371, %v1180
      %v1286 = vadd.f32 %v372, %v1182
      %v1287 = vadd.f32 %v373, %v1185
      %v1288 = vadd.f32 %v374, %v1187
      %v1289 = vadd.f32 %v375, %v1190
      %v1290 = vadd.f32 %v376, %v1192
      %v1291 = vadd.f32 %v377, %v1195
      %v1292 = vadd.f32 %v378, %v1197
      %v1293 = vadd.f32 %v379, %v1200
      %v1294 = vadd.f32 %v380, %v1202
      %v1295 = vadd.f32 %v381, %v1205
      %v1296 = vadd.f32 %v382, %v1207
      %v1297 = vadd.f32 %v383, %v1210
      %v1298 = vadd.f32 %v384, %v1212
      %v1299 = vadd.f32 %v385, %v1215
      %v1300 = vadd.f32 %v386, %v1217
      %v1301 = vadd.f32 %v387, %v1220
      %v1302 = vadd.f32 %v388, %v1222
      %v1303 = vadd.f32 %v389, %v1225
      %v1304 = vadd.f32 %v390, %v1227
      %v1305 = vadd.f32 %v391, %v1230
      %v1306 = vadd.f32 %v392, %v1232
      %v1307 = vadd.f32 %v393, %v1235
      %v1308 = vadd.f32 %v394, %v1237
      %v1309 = vadd.f32 %v395, %v1240
      %v1310 = vadd.f32 %v396, %v1242
      %v1311 = vadd.f32 %v397, %v1245
      %v1312 = vadd.f32 %v398, %v1247
      %1313 = vst [vmem:[#allocation2] sm:$0xff] %v1249
      %1314 = vst [vmem:[#allocation2 + $0x8] sm:$0xff] %v1250
      %1315 = vst [vmem:[#allocation2 + $0x10] sm:$0xff] %v1251
      %1316 = vst [vmem:[#allocation2 + $0x18] sm:$0xff] %v1252
      %1317 = vst [vmem:[#allocation2 + $0x20] sm:$0xff] %v1253
      %1318 = vst [vmem:[#allocation2 + $0x28] sm:$0xff] %v1254
      %1319 = vst [vmem:[#allocation2 + $0x30] sm:$0xff] %v1255
      %1320 = vst [vmem:[#allocation2 + $0x38] sm:$0xff] %v1256
      %1321 = vst [vmem:[#allocation2 + $0x40] sm:$0xff] %v1257
      %1322 = vst [vmem:[#allocation2 + $0x48] sm:$0xff] %v1258
      %1323 = vst [vmem:[#allocation2 + $0x50] sm:$0xff] %v1259
      %1324 = vst [vmem:[#allocation2 + $0x58] sm:$0xff] %v1260
      %1325 = vst [vmem:[#allocation2 + $0x60] sm:$0xff] %v1261
      %1326 = vst [vmem:[#allocation2 + $0x68] sm:$0xff] %v1262
      %1327 = vst [vmem:[#allocation2 + $0x70] sm:$0xff] %v1263
      %1328 = vst [vmem:[#allocation2 + $0x78] sm:$0xff] %v1264
      %1329 = vst [vmem:[#allocation2 + $0x80] sm:$0xff] %v1265
      %1330 = vst [vmem:[#allocation2 + $0x88] sm:$0xff] %v1266
      %1331 = vst [vmem:[#allocation2 + $0x90] sm:$0xff] %v1267
      %1332 = vst [vmem:[#allocation2 + $0x98] sm:$0xff] %v1268
      %1333 = vst [vmem:[#allocation2 + $0xa0] sm:$0xff] %v1269
      %1334 = vst [vmem:[#allocation2 + $0xa8] sm:$0xff] %v1270
      %1335 = vst [vmem:[#allocation2 + $0xb0] sm:$0xff] %v1271
      %1336 = vst [vmem:[#allocation2 + $0xb8] sm:$0xff] %v1272
      %1337 = vst [vmem:[#allocation2 + $0xc0] sm:$0xff] %v1273
      %1338 = vst [vmem:[#allocation2 + $0xc8] sm:$0xff] %v1274
      %1339 = vst [vmem:[#allocation2 + $0xd0] sm:$0xff] %v1275
      %1340 = vst [vmem:[#allocation2 + $0xd8] sm:$0xff] %v1276
      %1341 = vst [vmem:[#allocation2 + $0xe0] sm:$0xff] %v1277
      %1342 = vst [vmem:[#allocation2 + $0xe8] sm:$0xff] %v1278
      %1343 = vst [vmem:[#allocation2 + $0xf0] sm:$0xff] %v1279
      %1344 = vst [vmem:[#allocation2 + $0xf8] sm:$0xff] %v1280
      %1345 = vst [vmem:[#allocation2 + $0x100] sm:$0xff] %v1281
      %1346 = vst [vmem:[#allocation2 + $0x108] sm:$0xff] %v1282
      %1347 = vst [vmem:[#allocation2 + $0x110] sm:$0xff] %v1283
      %1348 = vst [vmem:[#allocation2 + $0x118] sm:$0xff] %v1284
      %1349 = vst [vmem:[#allocation2 + $0x120] sm:$0xff] %v1285
      %1350 = vst [vmem:[#allocation2 + $0x128] sm:$0xff] %v1286
      %1351 = vst [vmem:[#allocation2 + $0x130] sm:$0xff] %v1287
      %1352 = vst [vmem:[#allocation2 + $0x138] sm:$0xff] %v1288
      %1353 = vst [vmem:[#allocation2 + $0x140] sm:$0xff] %v1289
      %1354 = vst [vmem:[#allocation2 + $0x148] sm:$0xff] %v1290
      %1355 = vst [vmem:[#allocation2 + $0x150] sm:$0xff] %v1291
      %1356 = vst [vmem:[#allocation2 + $0x158] sm:$0xff] %v1292
      %1357 = vst [vmem:[#allocation2 + $0x160] sm:$0xff] %v1293
      %1358 = vst [vmem:[#allocation2 + $0x168] sm:$0xff] %v1294
      %1359 = vst [vmem:[#allocation2 + $0x170] sm:$0xff] %v1295
      %1360 = vst [vmem:[#allocation2 + $0x178] sm:$0xff] %v1296
      %1361 = vst [vmem:[#allocation2 + $0x180] sm:$0xff] %v1297
      %1362 = vst [vmem:[#allocation2 + $0x188] sm:$0xff] %v1298
      %1363 = vst [vmem:[#allocation2 + $0x190] sm:$0xff] %v1299
      %1364 = vst [vmem:[#allocation2 + $0x198] sm:$0xff] %v1300
      %1365 = vst [vmem:[#allocation2 + $0x1a0] sm:$0xff] %v1301
      %1366 = vst [vmem:[#allocation2 + $0x1a8] sm:$0xff] %v1302
      %1367 = vst [vmem:[#allocation2 + $0x1b0] sm:$0xff] %v1303
      %1368 = vst [vmem:[#allocation2 + $0x1b8] sm:$0xff] %v1304
      %1369 = vst [vmem:[#allocation2 + $0x1c0] sm:$0xff] %v1305
      %1370 = vst [vmem:[#allocation2 + $0x1c8] sm:$0xff] %v1306
      %1371 = vst [vmem:[#allocation2 + $0x1d0] sm:$0xff] %v1307
      %1372 = vst [vmem:[#allocation2 + $0x1d8] sm:$0xff] %v1308
      %1373 = vst [vmem:[#allocation2 + $0x1e0] sm:$0xff] %v1309
      %1374 = vst [vmem:[#allocation2 + $0x1e8] sm:$0xff] %v1310
      %1375 = vst [vmem:[#allocation2 + $0x1f0] sm:$0xff] %v1311
      %1376 = vst [vmem:[#allocation2 + $0x1f8] sm:$0xff] %v1312
      // Predicated region
      $region37: #{matmul_bias_act.1} parent=31 // pred_check
        %p1377 = pneg %p267
      $region38: #{matmul_bias_act.1} parent=31 // pred_check_branch
        %1379 = sbr.rel (%p1377) target = $region40
      $region39: #{matmul_bias_act.1} parent=31 // pred_region
        %v1380 = vld [vmem:[#allocation2] sm:$0xff]
        %v1381 = vld [vmem:[#allocation2 + $0x8] sm:$0xff]
        %v1382 = vld [vmem:[#allocation2 + $0x10] sm:$0xff]
        %v1383 = vld [vmem:[#allocation2 + $0x18] sm:$0xff]
        %v1384 = vld [vmem:[#allocation2 + $0x20] sm:$0xff]
        %v1385 = vld [vmem:[#allocation2 + $0x28] sm:$0xff]
        %v1386 = vld [vmem:[#allocation2 + $0x30] sm:$0xff]
        %v1387 = vld [vmem:[#allocation2 + $0x38] sm:$0xff]
        %v1388 = vld [vmem:[#allocation2 + $0x40] sm:$0xff]
        %v1389 = vld [vmem:[#allocation2 + $0x48] sm:$0xff]
        %v1390 = vld [vmem:[#allocation2 + $0x50] sm:$0xff]
        %v1391 = vld [vmem:[#allocation2 + $0x58] sm:$0xff]
        %v1392 = vld [vmem:[#allocation2 + $0x60] sm:$0xff]
        %v1393 = vld [vmem:[#allocation2 + $0x68] sm:$0xff]
        %v1394 = vld [vmem:[#allocation2 + $0x70] sm:$0xff]
        %v1395 = vld [vmem:[#allocation2 + $0x78] sm:$0xff]
        %v1396 = vld [vmem:[#allocation2 + $0x80] sm:$0xff]
        %v1397 = vld [vmem:[#allocation2 + $0x88] sm:$0xff]
        %v1398 = vld [vmem:[#allocation2 + $0x90] sm:$0xff]
        %v1399 = vld [vmem:[#allocation2 + $0x98] sm:$0xff]
        %v1400 = vld [vmem:[#allocation2 + $0xa0] sm:$0xff]
        %v1401 = vld [vmem:[#allocation2 + $0xa8] sm:$0xff]
        %v1402 = vld [vmem:[#allocation2 + $0xb0] sm:$0xff]
        %v1403 = vld [vmem:[#allocation2 + $0xb8] sm:$0xff]
        %v1404 = vld [vmem:[#allocation2 + $0xc0] sm:$0xff]
        %v1405 = vld [vmem:[#allocation2 + $0xc8] sm:$0xff]
        %v1406 = vld [vmem:[#allocation2 + $0xd0] sm:$0xff]
        %v1407 = vld [vmem:[#allocation2 + $0xd8] sm:$0xff]
        %v1408 = vld [vmem:[#allocation2 + $0xe0] sm:$0xff]
        %v1409 = vld [vmem:[#allocation2 + $0xe8] sm:$0xff]
        %v1410 = vld [vmem:[#allocation2 + $0xf0] sm:$0xff]
        %v1411 = vld [vmem:[#allocation2 + $0xf8] sm:$0xff]
        %v1412 = vld [vmem:[#allocation2 + $0x100] sm:$0xff]
        %v1413 = vld [vmem:[#allocation2 + $0x108] sm:$0xff]
        %v1414 = vld [vmem:[#allocation2 + $0x110] sm:$0xff]
        %v1415 = vld [vmem:[#allocation2 + $0x118] sm:$0xff]
        %v1416 = vld [vmem:[#allocation2 + $0x120] sm:$0xff]
        %v1417 = vld [vmem:[#allocation2 + $0x128] sm:$0xff]
        %v1418 = vld [vmem:[#allocation2 + $0x130] sm:$0xff]
        %v1419 = vld [vmem:[#allocation2 + $0x138] sm:$0xff]
        %v1420 = vld [vmem:[#allocation2 + $0x140] sm:$0xff]
        %v1421 = vld [vmem:[#allocation2 + $0x148] sm:$0xff]
        %v1422 = vld [vmem:[#allocation2 + $0x150] sm:$0xff]
        %v1423 = vld [vmem:[#allocation2 + $0x158] sm:$0xff]
        %v1424 = vld [vmem:[#allocation2 + $0x160] sm:$0xff]
        %v1425 = vld [vmem:[#allocation2 + $0x168] sm:$0xff]
        %v1426 = vld [vmem:[#allocation2 + $0x170] sm:$0xff]
        %v1427 = vld [vmem:[#allocation2 + $0x178] sm:$0xff]
        %v1428 = vld [vmem:[#allocation2 + $0x180] sm:$0xff]
        %v1429 = vld [vmem:[#allocation2 + $0x188] sm:$0xff]
        %v1430 = vld [vmem:[#allocation2 + $0x190] sm:$0xff]
        %v1431 = vld [vmem:[#allocation2 + $0x198] sm:$0xff]
        %v1432 = vld [vmem:[#allocation2 + $0x1a0] sm:$0xff]
        %v1433 = vld [vmem:[#allocation2 + $0x1a8] sm:$0xff]
        %v1434 = vld [vmem:[#allocation2 + $0x1b0] sm:$0xff]
        %v1435 = vld [vmem:[#allocation2 + $0x1b8] sm:$0xff]
        %v1436 = vld [vmem:[#allocation2 + $0x1c0] sm:$0xff]
        %v1437 = vld [vmem:[#allocation2 + $0x1c8] sm:$0xff]
        %v1438 = vld [vmem:[#allocation2 + $0x1d0] sm:$0xff]
        %v1439 = vld [vmem:[#allocation2 + $0x1d8] sm:$0xff]
        %v1440 = vld [vmem:[#allocation2 + $0x1e0] sm:$0xff]
        %v1441 = vld [vmem:[#allocation2 + $0x1e8] sm:$0xff]
        %v1442 = vld [vmem:[#allocation2 + $0x1f0] sm:$0xff]
        %v1443 = vld [vmem:[#allocation2 + $0x1f8] sm:$0xff]
        %v1444 = vld [vmem:[%s257] sm:$0x1]
        %v1446 = vperm.slane %v1444, 0
        %v1448 = vadd.f32 %v1380, %v1446
        %v1449 = vadd.f32 %v1381, %v1446
        %v1450 = vadd.f32 %v1382, %v1446
        %v1451 = vadd.f32 %v1383, %v1446
        %v1452 = vadd.f32 %v1384, %v1446
        %v1453 = vadd.f32 %v1385, %v1446
        %v1454 = vadd.f32 %v1386, %v1446
        %v1455 = vadd.f32 %v1387, %v1446
        %v1456 = vadd.f32 %v1388, %v1446
        %v1457 = vadd.f32 %v1389, %v1446
        %v1458 = vadd.f32 %v1390, %v1446
        %v1459 = vadd.f32 %v1391, %v1446
        %v1460 = vadd.f32 %v1392, %v1446
        %v1461 = vadd.f32 %v1393, %v1446
        %v1462 = vadd.f32 %v1394, %v1446
        %v1463 = vadd.f32 %v1395, %v1446
        %v1464 = vadd.f32 %v1396, %v1446
        %v1465 = vadd.f32 %v1397, %v1446
        %v1466 = vadd.f32 %v1398, %v1446
        %v1467 = vadd.f32 %v1399, %v1446
        %v1468 = vadd.f32 %v1400, %v1446
        %v1469 = vadd.f32 %v1401, %v1446
        %v1470 = vadd.f32 %v1402, %v1446
        %v1471 = vadd.f32 %v1403, %v1446
        %v1472 = vadd.f32 %v1404, %v1446
        %v1473 = vadd.f32 %v1405, %v1446
        %v1474 = vadd.f32 %v1406, %v1446
        %v1475 = vadd.f32 %v1407, %v1446
        %v1476 = vadd.f32 %v1408, %v1446
        %v1477 = vadd.f32 %v1409, %v1446
        %v1478 = vadd.f32 %v1410, %v1446
        %v1479 = vadd.f32 %v1411, %v1446
        %v1480 = vadd.f32 %v1412, %v1446
        %v1481 = vadd.f32 %v1413, %v1446
        %v1482 = vadd.f32 %v1414, %v1446
        %v1483 = vadd.f32 %v1415, %v1446
        %v1484 = vadd.f32 %v1416, %v1446
        %v1485 = vadd.f32 %v1417, %v1446
        %v1486 = vadd.f32 %v1418, %v1446
        %v1487 = vadd.f32 %v1419, %v1446
        %v1488 = vadd.f32 %v1420, %v1446
        %v1489 = vadd.f32 %v1421, %v1446
        %v1490 = vadd.f32 %v1422, %v1446
        %v1491 = vadd.f32 %v1423, %v1446
        %v1492 = vadd.f32 %v1424, %v1446
        %v1493 = vadd.f32 %v1425, %v1446
        %v1494 = vadd.f32 %v1426, %v1446
        %v1495 = vadd.f32 %v1427, %v1446
        %v1496 = vadd.f32 %v1428, %v1446
        %v1497 = vadd.f32 %v1429, %v1446
        %v1498 = vadd.f32 %v1430, %v1446
        %v1499 = vadd.f32 %v1431, %v1446
        %v1500 = vadd.f32 %v1432, %v1446
        %v1501 = vadd.f32 %v1433, %v1446
        %v1502 = vadd.f32 %v1434, %v1446
        %v1503 = vadd.f32 %v1435, %v1446
        %v1504 = vadd.f32 %v1436, %v1446
        %v1505 = vadd.f32 %v1437, %v1446
        %v1506 = vadd.f32 %v1438, %v1446
        %v1507 = vadd.f32 %v1439, %v1446
        %v1508 = vadd.f32 %v1440, %v1446
        %v1509 = vadd.f32 %v1441, %v1446
        %v1510 = vadd.f32 %v1442, %v1446
        %v1511 = vadd.f32 %v1443, %v1446
        %v1512 = vmax.f32 %v1448, 0.0
        %v1513 = vmax.f32 %v1449, 0.0
        %v1514 = vmax.f32 %v1450, 0.0
        %v1515 = vmax.f32 %v1451, 0.0
        %v1516 = vmax.f32 %v1452, 0.0
        %v1517 = vmax.f32 %v1453, 0.0
        %v1518 = vmax.f32 %v1454, 0.0
        %v1519 = vmax.f32 %v1455, 0.0
        %v1520 = vmax.f32 %v1456, 0.0
        %v1521 = vmax.f32 %v1457, 0.0
        %v1522 = vmax.f32 %v1458, 0.0
        %v1523 = vmax.f32 %v1459, 0.0
        %v1524 = vmax.f32 %v1460, 0.0
        %v1525 = vmax.f32 %v1461, 0.0
        %v1526 = vmax.f32 %v1462, 0.0
        %v1527 = vmax.f32 %v1463, 0.0
        %v1528 = vmax.f32 %v1464, 0.0
        %v1529 = vmax.f32 %v1465, 0.0
        %v1530 = vmax.f32 %v1466, 0.0
        %v1531 = vmax.f32 %v1467, 0.0
        %v1532 = vmax.f32 %v1468, 0.0
        %v1533 = vmax.f32 %v1469, 0.0
        %v1534 = vmax.f32 %v1470, 0.0
        %v1535 = vmax.f32 %v1471, 0.0
        %v1536 = vmax.f32 %v1472, 0.0
        %v1537 = vmax.f32 %v1473, 0.0
        %v1538 = vmax.f32 %v1474, 0.0
        %v1539 = vmax.f32 %v1475, 0.0
        %v1540 = vmax.f32 %v1476, 0.0
        %v1541 = vmax.f32 %v1477, 0.0
        %v1542 = vmax.f32 %v1478, 0.0
        %v1543 = vmax.f32 %v1479, 0.0
        %v1544 = vmax.f32 %v1480, 0.0
        %v1545 = vmax.f32 %v1481, 0.0
        %v1546 = vmax.f32 %v1482, 0.0
        %v1547 = vmax.f32 %v1483, 0.0
        %v1548 = vmax.f32 %v1484, 0.0
        %v1549 = vmax.f32 %v1485, 0.0
        %v1550 = vmax.f32 %v1486, 0.0
        %v1551 = vmax.f32 %v1487, 0.0
        %v1552 = vmax.f32 %v1488, 0.0
        %v1553 = vmax.f32 %v1489, 0.0
        %v1554 = vmax.f32 %v1490, 0.0
        %v1555 = vmax.f32 %v1491, 0.0
        %v1556 = vmax.f32 %v1492, 0.0
        %v1557 = vmax.f32 %v1493, 0.0
        %v1558 = vmax.f32 %v1494, 0.0
        %v1559 = vmax.f32 %v1495, 0.0
        %v1560 = vmax.f32 %v1496, 0.0
        %v1561 = vmax.f32 %v1497, 0.0
        %v1562 = vmax.f32 %v1498, 0.0
        %v1563 = vmax.f32 %v1499, 0.0
        %v1564 = vmax.f32 %v1500, 0.0
        %v1565 = vmax.f32 %v1501, 0.0
        %v1566 = vmax.f32 %v1502, 0.0
        %v1567 = vmax.f32 %v1503, 0.0
        %v1568 = vmax.f32 %v1504, 0.0
        %v1569 = vmax.f32 %v1505, 0.0
        %v1570 = vmax.f32 %v1506, 0.0
        %v1571 = vmax.f32 %v1507, 0.0
        %v1572 = vmax.f32 %v1508, 0.0
        %v1573 = vmax.f32 %v1509, 0.0
        %v1574 = vmax.f32 %v1510, 0.0
        %v1575 = vmax.f32 %v1511, 0.0
        %1576 = vst [vmem:[%s265] sm:$0xff] %v1512
        %1577 = vst [vmem:[%s265 + $0x8] sm:$0xff] %v1513
        %1578 = vst [vmem:[%s265 + $0x10] sm:$0xff] %v1514
        %1579 = vst [vmem:[%s265 + $0x18] sm:$0xff] %v1515
        %1580 = vst [vmem:[%s265 + $0x20] sm:$0xff] %v1516
        %1581 = vst [vmem:[%s265 + $0x28] sm:$0xff] %v1517
        %1582 = vst [vmem:[%s265 + $0x30] sm:$0xff] %v1518
        %1583 = vst [vmem:[%s265 + $0x38] sm:$0xff] %v1519
        %1584 = vst [vmem:[%s265 + $0x40] sm:$0xff] %v1520
        %1585 = vst [vmem:[%s265 + $0x48] sm:$0xff] %v1521
        %1586 = vst [vmem:[%s265 + $0x50] sm:$0xff] %v1522
        %1587 = vst [vmem:[%s265 + $0x58] sm:$0xff] %v1523
        %1588 = vst [vmem:[%s265 + $0x60] sm:$0xff] %v1524
        %1589 = vst [vmem:[%s265 + $0x68] sm:$0xff] %v1525
        %1590 = vst [vmem:[%s265 + $0x70] sm:$0xff] %v1526
        %1591 = vst [vmem:[%s265 + $0x78] sm:$0xff] %v1527
        %1592 = vst [vmem:[%s265 + $0x80] sm:$0xff] %v1528
        %1593 = vst [vmem:[%s265 + $0x88] sm:$0xff] %v1529
        %1594 = vst [vmem:[%s265 + $0x90] sm:$0xff] %v1530
        %1595 = vst [vmem:[%s265 + $0x98] sm:$0xff] %v1531
        %1596 = vst [vmem:[%s265 + $0xa0] sm:$0xff] %v1532
        %1597 = vst [vmem:[%s265 + $0xa8] sm:$0xff] %v1533
        %1598 = vst [vmem:[%s265 + $0xb0] sm:$0xff] %v1534
        %1599 = vst [vmem:[%s265 + $0xb8] sm:$0xff] %v1535
        %1600 = vst [vmem:[%s265 + $0xc0] sm:$0xff] %v1536
        %1601 = vst [vmem:[%s265 + $0xc8] sm:$0xff] %v1537
        %1602 = vst [vmem:[%s265 + $0xd0] sm:$0xff] %v1538
        %1603 = vst [vmem:[%s265 + $0xd8] sm:$0xff] %v1539
        %1604 = vst [vmem:[%s265 + $0xe0] sm:$0xff] %v1540
        %1605 = vst [vmem:[%s265 + $0xe8] sm:$0xff] %v1541
        %1606 = vst [vmem:[%s265 + $0xf0] sm:$0xff] %v1542
        %1607 = vst [vmem:[%s265 + $0xf8] sm:$0xff] %v1543
        %1608 = vst [vmem:[%s265 + $0x100] sm:$0xff] %v1544
        %1609 = vst [vmem:[%s265 + $0x108] sm:$0xff] %v1545
        %1610 = vst [vmem:[%s265 + $0x110] sm:$0xff] %v1546
        %1611 = vst [vmem:[%s265 + $0x118] sm:$0xff] %v1547
        %1612 = vst [vmem:[%s265 + $0x120] sm:$0xff] %v1548
        %1613 = vst [vmem:[%s265 + $0x128] sm:$0xff] %v1549
        %1614 = vst [vmem:[%s265 + $0x130] sm:$0xff] %v1550
        %1615 = vst [vmem:[%s265 + $0x138] sm:$0xff] %v1551
        %1616 = vst [vmem:[%s265 + $0x140] sm:$0xff] %v1552
        %1617 = vst [vmem:[%s265 + $0x148] sm:$0xff] %v1553
        %1618 = vst [vmem:[%s265 + $0x150] sm:$0xff] %v1554
        %1619 = vst [vmem:[%s265 + $0x158] sm:$0xff] %v1555
        %1620 = vst [vmem:[%s265 + $0x160] sm:$0xff] %v1556
        %1621 = vst [vmem:[%s265 + $0x168] sm:$0xff] %v1557
        %1622 = vst [vmem:[%s265 + $0x170] sm:$0xff] %v1558
        %1623 = vst [vmem:[%s265 + $0x178] sm:$0xff] %v1559
        %1624 = vst [vmem:[%s265 + $0x180] sm:$0xff] %v1560
        %1625 = vst [vmem:[%s265 + $0x188] sm:$0xff] %v1561
        %1626 = vst [vmem:[%s265 + $0x190] sm:$0xff] %v1562
        %1627 = vst [vmem:[%s265 + $0x198] sm:$0xff] %v1563
        %1628 = vst [vmem:[%s265 + $0x1a0] sm:$0xff] %v1564
        %1629 = vst [vmem:[%s265 + $0x1a8] sm:$0xff] %v1565
        %1630 = vst [vmem:[%s265 + $0x1b0] sm:$0xff] %v1566
        %1631 = vst [vmem:[%s265 + $0x1b8] sm:$0xff] %v1567
        %1632 = vst [vmem:[%s265 + $0x1c0] sm:$0xff] %v1568
        %1633 = vst [vmem:[%s265 + $0x1c8] sm:$0xff] %v1569
        %1634 = vst [vmem:[%s265 + $0x1d0] sm:$0xff] %v1570
        %1635 = vst [vmem:[%s265 + $0x1d8] sm:$0xff] %v1571
        %1636 = vst [vmem:[%s265 + $0x1e0] sm:$0xff] %v1572
        %1637 = vst [vmem:[%s265 + $0x1e8] sm:$0xff] %v1573
        %1638 = vst [vmem:[%s265 + $0x1f0] sm:$0xff] %v1574
        %1639 = vst [vmem:[%s265 + $0x1f8] sm:$0xff] %v1575
      $region40: #{matmul_bias_act.1} parent=31 // pred_fallthru
        _
      %s1640 = smul.u32 64, %s19
      %p1641 = scmp.lt.s32.totalorder %s1640, 1151
      %s1642 = scalar_select %p1641, %s1640, 1151
      %p1643 = scmp.lt.s32.totalorder %s20, 0
      %s1644 = scalar_select %p1643, %s20, 0
      %s1645 = sadd.s32 %s1644, %s1642
      %s1646 = smul.addr %s1645, 8
      %s1647 = scalar_lea.vmem %s3, %s1646
      // Predicated region
      $region41: #{matmul_bias_act.1} parent=31 // pred_check
        %p1648 = pneg %p135
      $region42: #{matmul_bias_act.1} parent=31 // pred_check_branch
        %1650 = sbr.rel (%p1648) target = $region44
      $region43: #{matmul_bias_act.1} parent=31 // pred_region
        %s1651 = smul.u32 64, %s19
      $region44: #{matmul_bias_act.1} parent=31 // pred_fallthru
        _
    $region32: #{matmul_bias_act.1} parent=5 // pred_fallthru
      _
    %p1652 = scmp.le.s32.totalorder 2, %s9
    // Predicated region
    $region45: #{matmul_bias_act.1} parent=5 // pred_check
      %p1653 = pneg %p1652
    $region46: #{matmul_bias_act.1} parent=5 // pred_check_branch
      %1655 = sbr.rel (%p1653) target = $region48
    $region47: #{matmul_bias_act.1} parent=5 // pred_region
      %s1656 = ssub.s32 %s9, 2
      // Predicated region
      $region49: #{matmul_bias_act.1} parent=47 // pred_check
        %p1657 = pneg %p141
      $region50: #{matmul_bias_act.1} parent=47 // pred_check_branch
        %1659 = sbr.rel (%p1657) target = $region52
      $region51: #{matmul_bias_act.1} parent=47 // pred_region
        %s1660 = smul.u32 64, %s22
        %p1661 = scmp.lt.s32.totalorder %s1660, 1151
        %s1662 = scalar_select %p1661, %s1660, 1151
        %p1663 = scmp.lt.s32.totalorder %s23, 0
        %s1664 = scalar_select %p1663, %s23, 0
        %s1665 = sadd.s32 %s1664, %s1662
        %s1666 = smul.addr %s1665, 8
        %s1667 = scalar_lea.vmem %s3, %s1666
      $region52: #{matmul_bias_act.1} parent=47 // pred_fallthru
        _
    $region48: #{matmul_bias_act.1} parent=5 // pred_fallthru
      _
  $region6: #{matmul_bias_act.1} parent=0 // loop_footer
    %s13 = sadd.s32 1, %s9
  $region7: #{matmul_bias_act.1} parent=0 // loop_footer_branch
    %8 = sbr.rel target = $region3
  $region8: #{matmul_bias_act.1} parent=0 // loop_exit
    _

</llo_original>
